<compile_context>
chip_gen: v7x
topology: tpu7x:2x2x1
jax: 0.10.0
libtpu: 0.0.40
codegen_flags: <defaults>
</compile_context>

<pallas_src>
import jax
import jax.numpy as jnp
from jax import lax
from jax.experimental import pallas as pl
from jax.experimental.pallas import tpu as pltpu


# 2-D dot_general dimension numbers (no batch dims).
_DN_NN = (((1,), (0,)), ((), ()))   # A @ B
_DN_NT = (((1,), (1,)), ((), ()))   # A @ B^T  (contract last dims, no transpose)

# Guards exp-underflow (all entries of a row/col far below the global max)
# from turning into 1/0 -> inf/NaN with the approximate reciprocal.
_SOFTMAX_EPS = 1e-30


def _tpu_vmem_capacity_bytes():
    """Physical VMEM per TensorCore; conservative (v7x-sized) fallback."""
    try:
        return int(pltpu.get_tpu_info().vmem_capacity_bytes)
    except Exception:
        return 64 << 20


def _pick_block_batch(B, per_batch_bytes, *, two_core_chip, budget_bytes):
    """Largest per-step batch block that divides B and fits the VMEM budget.

    On two-TensorCore chips (v7x-class) keep >= 2 grid steps (ideally an even
    number) so both cores get work; on single-TC chips (v5e/v6e, 128 MiB VMEM)
    just use the whole budget -- extra grid steps only add per-step overhead.
    """
    cap = max(1, budget_bytes // max(per_batch_bytes, 1))
    divisors = [d for d in range(1, B + 1) if B % d == 0 and d <= cap]
    if not divisors:
        return 1
    if not two_core_chip or B == 1:
        return divisors[-1]
    even = [d for d in divisors if (B // d) >= 2 and (B // d) % 2 == 0]
    if even:
        return even[-1]
    multi = [d for d in divisors if (B // d) >= 2]
    return multi[-1] if multi else divisors[-1]


def coattention(Q, D, W, b, *, block_batch=None,
                compute_dtype=jnp.bfloat16, approx_recip=True):
    """Q: (B, n_q, h1), D: (B, n_d, h), W: (h, h1) (pre-transposed nn.Linear
    weight), b: (h1,)  ->  (B, n_d, 2*h1)."""
    B, n_q, h1 = Q.shape
    B2, n_d, h = D.shape
    assert B2 == B and W.shape == (h, h1) and b.shape == (h1,)

    out_dtype = Q.dtype
    f32 = jnp.float32
    cd = jnp.dtype(compute_dtype)

    # Cast matmul operands once in the wrapper: halves HBM DMA bytes and VMEM
    # tile footprint on the bf16 fast path and removes all per-matmul casts of
    # Q/D/W inside the kernel.  Bias stays f32 (added to the f32 accumulator).
    Qc = Q if Q.dtype == cd else Q.astype(cd)
    Dc = D if D.dtype == cd else D.astype(cd)
    Wc = W if W.dtype == cd else W.astype(cd)
    b2 = b.reshape(1, h1).astype(f32)

    vmem_cap = _tpu_vmem_capacity_bytes()
    big_vmem = vmem_cap >= (100 << 20)      # v5e / v6e class: 128 MiB, single TC

    io_item = Qc.dtype.itemsize
    out_item = jnp.dtype(out_dtype).itemsize
    # Per-batch-element VMEM working set: double-buffered IO tiles + f32 Dp
    # scratch + loop-body temporaries (L, e, e^T, e^T_scaled, C_Q^T, X, out).
    per_b = (2 * (n_q * h1 * io_item + n_d * h * io_item + n_d * 2 * h1 * out_item)
             + 4 * n_d * h1
             + 4 * (3 * n_q * n_d + n_q * h1 + n_q * 2 * h1 + n_d * 2 * h1))

    if block_batch is not None:
        Bt = block_batch
    else:
        Bt = _pick_block_batch(
            B, per_b, two_core_chip=not big_vmem,
            budget_bytes=(20 << 20) if big_vmem else (10 << 20))
    assert B % Bt == 0, (B, Bt)

    def _recip(x):
        return pl.reciprocal(x, approx=True) if approx_recip else 1.0 / x

    def _cast(x):
        return x if x.dtype == cd else x.astype(cd)

    def kernel(q_ref, d_ref, w_ref, b_ref, o_ref, dp_ref):
        W_ = w_ref[...]                       # (h, h1), already in compute dtype
        bias = b_ref[...]                     # (1, h1) f32

        # Fused document projection for the whole batch block: one MXU call
        # with M = Bt * n_d rows, then written to a VMEM scratch so the
        # per-batch loop below only keeps one (n_d, h1) slice live.
        d2 = d_ref[...].reshape(Bt * n_d, h)
        dp = jnp.tanh(
            lax.dot_general(d2, W_, _DN_NN, preferred_element_type=f32) + bias)
        dp_ref[...] = dp.reshape(Bt, n_d, h1)                       # f32 scratch

        def body(bi, carry):
            Qb = q_ref[bi]                    # (n_q, h1), compute dtype
            Dp_b = dp_ref[bi]                 # (n_d, h1), f32

            # L = Q @ Dp^T (NT dot: contract feature axes, no Dp transpose).
            L = lax.dot_general(Qb, _cast(Dp_b), _DN_NT,
                                preferred_element_type=f32)         # (n_q, n_d)

            # One shared exp feeds BOTH softmaxes (a constant shift cancels in
            # either normalization).  eps keeps an all-underflow row/col from
            # producing inf/NaN through the approximate reciprocal.
            m = jnp.max(jnp.max(L, axis=1, keepdims=True), axis=0, keepdims=True)
            e = jnp.exp(L - m)                # (n_q, n_d) f32
            et = e.T                          # (n_d, n_q): single XLU transpose,
                                              # reused by both denominators and
                                              # the output matmul.
            # TODO(synk): if a bundle dump shows a relayout here for ragged
            # (n_q, n_d), pad L to (8,128)-aligned tiles before transposing.

            inv_col = _recip(jnp.sum(et, axis=1, keepdims=True) + _SOFTMAX_EPS)   # (n_d, 1)
            inv_row_t = _recip(jnp.sum(et, axis=0, keepdims=True) + _SOFTMAX_EPS)  # (1, n_q)

            # C_Q^T = A_Q @ Dp == e @ (Dp * inv_col)   (A_Q never materialized)
            CQt = lax.dot_general(_cast(e), _cast(Dp_b * inv_col), _DN_NN,
                                  preferred_element_type=f32)        # (n_q, h1)

            # out = A_D^T @ [Q | C_Q^T] == (e^T * inv_row^T) @ [Q | C_Q^T]
            # Fold the row-softmax denominator ONCE into the shared LHS.
            et_s = _cast(et * inv_row_t)      # (n_d, n_q)

            if h1 % 128 == 0:
                # Lane-aligned halves: two matmuls sharing the LHS, two
                # lane-dense stores (no concat needed).
                out_q = lax.dot_general(et_s, Qb, _DN_NN,
                                        preferred_element_type=f32)
                out_c = lax.dot_general(et_s, _cast(CQt), _DN_NN,
                                        preferred_element_type=f32)
                o_ref[bi, :, :h1] = out_q.astype(o_ref.dtype)
                o_ref[bi, :, h1:] = out_c.astype(o_ref.dtype)
            else:
                # h1 not a lane multiple: fuse into one MXU call and ONE
                # full-tile lane-dense store (avoids masked vst at offset h1).
                X = jnp.concatenate([Qb, _cast(CQt)], axis=-1)       # (n_q, 2*h1)
                out = lax.dot_general(et_s, X, _DN_NN,
                                      preferred_element_type=f32)    # (n_d, 2*h1)
                o_ref[bi] = out.astype(o_ref.dtype)
            return carry

        # fori_loop bounds the live set (vs. a growing static Python unroll).
        lax.fori_loop(0, Bt, body, 0, unroll=(Bt <= 4))

    # Advisory cost estimate so XLA schedules around the custom call sensibly.
    flops = B * (2 * n_d * h * h1 + 8 * n_q * n_d * h1)
    transcendentals = B * (n_d * h1 + n_q * n_d)          # tanh + exp
    bytes_accessed = (Qc.size * Qc.dtype.itemsize + Dc.size * Dc.dtype.itemsize
                      + Wc.size * Wc.dtype.itemsize + b2.size * 4
                      + B * n_d * 2 * h1 * out_item)

    # VMEM request: IO tiles + weights + scratch + temps, with headroom left
    # for compiler scratch/semaphores (never ask for the whole physical VMEM).
    need = Bt * per_b + 2 * (Wc.size * Wc.dtype.itemsize + h1 * 4) + (2 << 20)
    vmem_ceiling = max(32 << 20, vmem_cap - (8 << 20))
    vmem_limit = int(min(vmem_ceiling, max(32 << 20, need)))

    def build(single_buffer_params):
        # Grid-invariant weight/bias never change block index, so they do not
        # need double-buffering; request a single buffer when supported.
        extra = dict(pipeline_mode=pl.Buffered(1)) if single_buffer_params else {}
        return pl.pallas_call(
            kernel,
            out_shape=jax.ShapeDtypeStruct((B, n_d, 2 * h1), out_dtype),
            grid_spec=pltpu.PrefetchScalarGridSpec(
                num_scalar_prefetch=0,
                grid=(B // Bt,),
                in_specs=[
                    pl.BlockSpec((Bt, n_q, h1), lambda i: (i, 0, 0)),
                    pl.BlockSpec((Bt, n_d, h), lambda i: (i, 0, 0)),
                    pl.BlockSpec((h, h1), lambda i: (0, 0), **extra),
                    pl.BlockSpec((1, h1), lambda i: (0, 0), **extra),
                ],
                out_specs=pl.BlockSpec((Bt, n_d, 2 * h1), lambda i: (i, 0, 0)),
                scratch_shapes=[pltpu.VMEM((Bt, n_d, h1), jnp.float32)],
            ),
            compiler_params=pltpu.CompilerParams(
                dimension_semantics=("parallel",),
                vmem_limit_bytes=vmem_limit,
            ),
            cost_estimate=pl.CostEstimate(
                flops=flops, transcendentals=transcendentals,
                bytes_accessed=bytes_accessed),
        )

    try:
        return build(True)(Qc, Dc, Wc, b2)
    except Exception:
        # pipeline_mode=pl.Buffered(1) not supported on this jax version /
        # backend: fall back to default double-buffering of W / bias.
        return build(False)(Qc, Dc, Wc, b2)


def coattention_ref(Q, D, W, b, matmul_dtype=None):
    """Pure-JAX reference mirroring the torch forward exactly.  If matmul_dtype
    is given, matmul operands are cast to it (f32 accumulation), matching the
    kernel's low-precision MXU path."""
    def ein(eq, a, bb):
        if matmul_dtype is not None:
            a, bb = a.astype(matmul_dtype), bb.astype(matmul_dtype)
        return jnp.einsum(eq, a, bb, preferred_element_type=jnp.float32)

    Dp = jnp.tanh(ein("bnh,hk->bnk", D, W) + b)           # (B, n_d, h1)
    D_t = jnp.swapaxes(Dp, 1, 2)                          # (B, h1, n_d)
    L = ein("bqk,bkn->bqn", Q, D_t)                       # (B, n_q, n_d)
    A_Q_ = jax.nn.softmax(L, axis=1)
    A_Q = jnp.swapaxes(A_Q_, 1, 2)                        # (B, n_d, n_q)
    C_Q = ein("bkn,bnq->bkq", D_t, A_Q)                   # (B, h1, n_q)
    Q_t = jnp.swapaxes(Q, 1, 2)                           # (B, h1, n_q)
    A_D = jax.nn.softmax(L, axis=2)                       # (B, n_q, n_d)
    C_D = ein("bcq,bqn->bcn", jnp.concatenate([Q_t, C_Q], axis=1), A_D)
    return jnp.swapaxes(C_D, 1, 2)                        # (B, n_d, 2*h1)


if __name__ == "__main__":
    B, n_q, n_d = 2, 8, 16
    hidden_dim, hidden_dim1 = 32, 32

    key = jax.random.PRNGKey(0)
    kq, kd, kw, kb = jax.random.split(key, 4)

    Q = jax.random.normal(kq, (B, n_q, hidden_dim1), dtype=jnp.float32)
    D = jax.random.normal(kd, (B, n_d, hidden_dim), dtype=jnp.float32)

    # Deterministic nn.Linear-style init: U(-1/sqrt(fan_in), 1/sqrt(fan_in)).
    bound = 1.0 / (hidden_dim ** 0.5)
    # Stored pre-transposed relative to torch's (out, in) weight: (h, h1).
    W = jax.random.uniform(kw, (hidden_dim, hidden_dim1), jnp.float32, -bound, bound)
    bvec = jax.random.uniform(kb, (hidden_dim1,), jnp.float32, -bound, bound)

    ref = coattention_ref(Q, D, W, bvec)

    # 1) Exact-math path (f32 MXU operands, exact reciprocals): tight check of
    #    the restructured math (shared exp, folded denominators, fused output
    #    matmul + lane-dense store).
    out_f32 = jax.block_until_ready(
        coattention(Q, D, W, bvec, compute_dtype=jnp.float32, approx_recip=False))
    assert out_f32.shape == (B, n_d, 2 * hidden_dim1), out_f32.shape
    err_f32 = float(jnp.max(jnp.abs(out_f32 - ref)))
    assert jnp.allclose(out_f32, ref, atol=2e-4, rtol=2e-4), err_f32

    # 2) Performance path (bf16 inputs/MXU operands + approx reciprocal):
    #    check against a matched low-precision reference, loosened tolerance.
    out_fast = jax.block_until_ready(coattention(Q, D, W, bvec))
    ref_bf16 = coattention_ref(Q, D, W, bvec, matmul_dtype=jnp.bfloat16)
    err_fast = float(jnp.max(jnp.abs(out_fast - ref_bf16)))
    assert out_fast.shape == (B, n_d, 2 * hidden_dim1), out_fast.shape
    assert jnp.allclose(out_fast, ref_bf16, atol=5e-2, rtol=5e-2), err_fast

    print("KERNEL_OK")
</pallas_src>

<mosaic_0001>
module attributes {stable_mosaic.version = 11 : i64} {
  func.func @kernel(%arg0: i32, %arg1: memref<1x8x32xf32, #tpu.memory_space<vmem>>, %arg2: memref<1x16x32xf32, #tpu.memory_space<vmem>>, %arg3: memref<32x32xf32, #tpu.memory_space<vmem>>, %arg4: memref<1x32xf32, #tpu.memory_space<vmem>>, %arg5: memref<1x16x64xf32, #tpu.memory_space<vmem>>, %arg6: memref<1x16x32xf32, #tpu.memory_space<vmem>>) attributes {dimension_semantics = [#tpu.dimension_semantics<parallel>], iteration_bounds = array<i64: 2>, scalar_prefetch = 0 : i64, scratch_operands = 1 : i64, tpu.core_type = #tpu.core_type<tc>, window_params = [{transform_indices = @transform_0, window_bounds = array<i64: 1, 8, 32>}, {transform_indices = @transform_1, window_bounds = array<i64: 1, 16, 32>}, {pipeline_mode = #tpu.pipeline_mode<synchronous>, transform_indices = @transform_2, window_bounds = array<i64: 32, 32>}, {pipeline_mode = #tpu.pipeline_mode<synchronous>, transform_indices = @transform_3, window_bounds = array<i64: 1, 32>}, {transform_indices = @transform_4, window_bounds = array<i64: 1, 16, 64>}]} {
    %c0 = arith.constant 0 : index
    %c0_0 = arith.constant 0 : index
    %0 = vector.load %arg3[%c0, %c0_0] : memref<32x32xf32, #tpu.memory_space<vmem>>, vector<32x32xf32>
    %c0_1 = arith.constant 0 : index
    %c0_2 = arith.constant 0 : index
    %1 = vector.load %arg4[%c0_1, %c0_2] : memref<1x32xf32, #tpu.memory_space<vmem>>, vector<1x32xf32>
    %c0_3 = arith.constant 0 : index
    %c0_4 = arith.constant 0 : index
    %c0_5 = arith.constant 0 : index
    %2 = vector.load %arg2[%c0_3, %c0_4, %c0_5] : memref<1x16x32xf32, #tpu.memory_space<vmem>>, vector<1x16x32xf32>
    %3 = vector.shape_cast %2 : vector<1x16x32xf32> to vector<16x32xf32>
    %cst = arith.constant dense<0.000000e+00> : vector<16x32xf32>
    %4 = tpu.matmul %3, %0, %cst {dimension_numbers = #tpu.dot_dimension_numbers<[1], [0], [0], [1], [0, 0, 1, 1], [], []>} : vector<16x32xf32>, vector<32x32xf32>, vector<16x32xf32> -> vector<16x32xf32>
    %5 = vector.broadcast %1 : vector<1x32xf32> to vector<16x32xf32>
    %6 = arith.addf %4, %5 : vector<16x32xf32>
    %7 = math.tanh %6 : vector<16x32xf32>
    %8 = vector.shape_cast %7 : vector<16x32xf32> to vector<1x16x32xf32>
    %c0_6 = arith.constant 0 : index
    %c0_7 = arith.constant 0 : index
    %c0_8 = arith.constant 0 : index
    %9 = vector.load %arg6[%c0_6, %c0_7, %c0_8] : memref<1x16x32xf32, #tpu.memory_space<vmem>>, vector<1x16x32xf32>
    tpu.vector_store %arg6[%c0_6, %c0_7, %c0_8], %8 {strides = array<i32>} : memref<1x16x32xf32, #tpu.memory_space<vmem>>, vector<1x16x32xf32>,
    %c0_i32 = arith.constant 0 : i32
    %10 = arith.index_cast %c0_i32 : i32 to index
    %c0_9 = arith.constant 0 : index
    %c0_10 = arith.constant 0 : index
    %11 = vector.load %arg1[%10, %c0_9, %c0_10] : memref<1x8x32xf32, #tpu.memory_space<vmem>>, vector<1x8x32xf32>
    %12 = vector.shape_cast %11 : vector<1x8x32xf32> to vector<8x32xf32>
    %13 = arith.index_cast %c0_i32 : i32 to index
    %c0_11 = arith.constant 0 : index
    %c0_12 = arith.constant 0 : index
    %14 = vector.load %arg6[%13, %c0_11, %c0_12] : memref<1x16x32xf32, #tpu.memory_space<vmem>>, vector<1x16x32xf32>
    %15 = vector.shape_cast %14 : vector<1x16x32xf32> to vector<16x32xf32>
    %cst_13 = arith.constant dense<0.000000e+00> : vector<8x16xf32>
    %16 = tpu.matmul %12, %15, %cst_13 {dimension_numbers = #tpu.dot_dimension_numbers<[1], [1], [0], [0], [0, 0, 1, 0], [], []>} : vector<8x32xf32>, vector<16x32xf32>, vector<8x16xf32> -> vector<8x16xf32>
    %cst_14 = arith.constant dense<0xFF800000> : vector<8xf32>
    %17 = vector.multi_reduction <maximumf>, %16, %cst_14 [1] : vector<8x16xf32> to vector<8xf32>
    %18 = vector.shape_cast %17 : vector<8xf32> to vector<8x1xf32>
    %cst_15 = arith.constant dense<0xFF800000> : vector<1xf32>
    %19 = vector.multi_reduction <maximumf>, %18, %cst_15 [0] : vector<8x1xf32> to vector<1xf32>
    %20 = vector.shape_cast %19 : vector<1xf32> to vector<1x1xf32>
    %21 = vector.broadcast %20 : vector<1x1xf32> to vector<8x16xf32>
    %22 = arith.subf %16, %21 : vector<8x16xf32>
    %23 = math.exp %22 : vector<8x16xf32>
    %24 = tpu.transpose %23, [1, 0] : vector<8x16xf32> -> vector<16x8xf32>
    %cst_16 = arith.constant dense<0.000000e+00> : vector<16xf32>
    %25 = vector.multi_reduction <add>, %24, %cst_16 [1] : vector<16x8xf32> to vector<16xf32>
    %26 = vector.shape_cast %25 : vector<16xf32> to vector<16x1xf32>
    %cst_17 = arith.constant 1.000000e-30 : f32
    %27 = vector.broadcast %cst_17 : f32 to vector<16x1xf32>
    %28 = arith.addf %26, %27 : vector<16x1xf32>
    %cst_18 = arith.constant 1.000000e+00 : f32
    %29 = vector.broadcast %cst_18 : f32 to vector<16x1xf32>
    %30 = arith.divf %29, %28 : vector<16x1xf32>
    %cst_19 = arith.constant dense<0.000000e+00> : vector<8xf32>
    %31 = vector.multi_reduction <add>, %24, %cst_19 [0] : vector<16x8xf32> to vector<8xf32>
    %32 = vector.shape_cast %31 : vector<8xf32> to vector<1x8xf32>
    %cst_20 = arith.constant 1.000000e-30 : f32
    %33 = vector.broadcast %cst_20 : f32 to vector<1x8xf32>
    %34 = arith.addf %32, %33 : vector<1x8xf32>
    %cst_21 = arith.constant 1.000000e+00 : f32
    %35 = vector.broadcast %cst_21 : f32 to vector<1x8xf32>
    %36 = arith.divf %35, %34 : vector<1x8xf32>
    %37 = vector.broadcast %30 : vector<16x1xf32> to vector<16x32xf32>
    %38 = arith.mulf %15, %37 : vector<16x32xf32>
    %cst_22 = arith.constant dense<0.000000e+00> : vector<8x32xf32>
    %39 = tpu.matmul %23, %38, %cst_22 {dimension_numbers = #tpu.dot_dimension_numbers<[1], [0], [0], [1], [0, 0, 1, 1], [], []>} : vector<8x16xf32>, vector<16x32xf32>, vector<8x32xf32> -> vector<8x32xf32>
    %40 = vector.broadcast %36 : vector<1x8xf32> to vector<16x8xf32>
    %41 = arith.mulf %24, %40 : vector<16x8xf32>
    %42 = tpu.concatenate %12, %39 in 1 : vector<8x32xf32>, vector<8x32xf32> -> vector<8x64xf32>
    %cst_23 = arith.constant dense<0.000000e+00> : vector<16x64xf32>
    %43 = tpu.matmul %41, %42, %cst_23 {dimension_numbers = #tpu.dot_dimension_numbers<[1], [0], [0], [1], [0, 0, 1, 1], [], []>} : vector<16x8xf32>, vector<8x64xf32>, vector<16x64xf32> -> vector<16x64xf32>
    %44 = arith.index_cast %c0_i32 : i32 to index
    %c0_24 = arith.constant 0 : index
    %c0_25 = arith.constant 0 : index
    %45 = vector.load %arg5[%44, %c0_24, %c0_25] : memref<1x16x64xf32, #tpu.memory_space<vmem>>, vector<1x16x64xf32>
    %46 = vector.shape_cast %45 : vector<1x16x64xf32> to vector<16x64xf32>
    %47 = vector.shape_cast %43 : vector<16x64xf32> to vector<1x16x64xf32>
    tpu.vector_store %arg5[%44, %c0_24, %c0_25], %47 {strides = array<i32>} : memref<1x16x64xf32, #tpu.memory_space<vmem>>, vector<1x16x64xf32>,
    %c1_i32 = arith.constant 1 : i32
    return
  }
  func.func @transform_0(%arg0: i32) -> (i32, i32, i32) {
    %c0_i32 = arith.constant 0 : i32
    %c0_i32_0 = arith.constant 0 : i32
    %c0_i32_1 = arith.constant 0 : i32
    return %arg0, %c0_i32, %c0_i32_0 : i32, i32, i32
  }
  func.func @transform_1(%arg0: i32) -> (i32, i32, i32) {
    %c0_i32 = arith.constant 0 : i32
    %c0_i32_0 = arith.constant 0 : i32
    %c0_i32_1 = arith.constant 0 : i32
    return %arg0, %c0_i32, %c0_i32_0 : i32, i32, i32
  }
  func.func @transform_2(%arg0: i32) -> (i32, i32) {
    %c0_i32 = arith.constant 0 : i32
    %c0_i32_0 = arith.constant 0 : i32
    %c0_i32_1 = arith.constant 0 : i32
    return %c0_i32, %c0_i32_0 : i32, i32
  }
  func.func @transform_3(%arg0: i32) -> (i32, i32) {
    %c0_i32 = arith.constant 0 : i32
    %c0_i32_0 = arith.constant 0 : i32
    %c0_i32_1 = arith.constant 0 : i32
    return %c0_i32, %c0_i32_0 : i32, i32
  }
  func.func @transform_4(%arg0: i32) -> (i32, i32, i32) {
    %c0_i32 = arith.constant 0 : i32
    %c0_i32_0 = arith.constant 0 : i32
    %c0_i32_1 = arith.constant 0 : i32
    return %arg0, %c0_i32, %c0_i32_0 : i32, i32, i32
  }
}

module attributes {stable_mosaic.version = 11 : i64} {
  func.func @kernel(%arg0: i32, %arg1: memref<1x8x32xf32, #tpu.memory_space<vmem>>, %arg2: memref<1x16x32xf32, #tpu.memory_space<vmem>>, %arg3: memref<32x32xf32, #tpu.memory_space<vmem>>, %arg4: memref<1x32xf32, #tpu.memory_space<vmem>>, %arg5: memref<1x16x64xf32, #tpu.memory_space<vmem>>, %arg6: memref<1x16x32xf32, #tpu.memory_space<vmem>>) attributes {dimension_semantics = [#tpu.dimension_semantics<parallel>], iteration_bounds = array<i64: 2>, scalar_prefetch = 0 : i64, scratch_operands = 1 : i64, tpu.core_type = #tpu.core_type<tc>, window_params = [{transform_indices = @transform_0, window_bounds = array<i64: 1, 8, 32>}, {transform_indices = @transform_1, window_bounds = array<i64: 1, 16, 32>}, {pipeline_mode = #tpu.pipeline_mode<synchronous>, transform_indices = @transform_2, window_bounds = array<i64: 32, 32>}, {pipeline_mode = #tpu.pipeline_mode<synchronous>, transform_indices = @transform_3, window_bounds = array<i64: 1, 32>}, {transform_indices = @transform_4, window_bounds = array<i64: 1, 16, 64>}]} {
    %c0 = arith.constant 0 : index
    %c0_0 = arith.constant 0 : index
    %0 = vector.load %arg3[%c0, %c0_0] : memref<32x32xf32, #tpu.memory_space<vmem>>, vector<32x32xf32>
    %c0_1 = arith.constant 0 : index
    %c0_2 = arith.constant 0 : index
    %1 = vector.load %arg4[%c0_1, %c0_2] : memref<1x32xf32, #tpu.memory_space<vmem>>, vector<1x32xf32>
    %c0_3 = arith.constant 0 : index
    %c0_4 = arith.constant 0 : index
    %c0_5 = arith.constant 0 : index
    %2 = vector.load %arg2[%c0_3, %c0_4, %c0_5] : memref<1x16x32xf32, #tpu.memory_space<vmem>>, vector<1x16x32xf32>
    %3 = vector.shape_cast %2 : vector<1x16x32xf32> to vector<16x32xf32>
    %cst = arith.constant dense<0.000000e+00> : vector<16x32xf32>
    %4 = tpu.matmul %3, %0, %cst {dimension_numbers = #tpu.dot_dimension_numbers<[1], [0], [0], [1], [0, 0, 1, 1], [], []>} : vector<16x32xf32>, vector<32x32xf32>, vector<16x32xf32> -> vector<16x32xf32>
    %5 = vector.broadcast %1 : vector<1x32xf32> to vector<16x32xf32>
    %6 = arith.addf %4, %5 : vector<16x32xf32>
    %7 = math.tanh %6 : vector<16x32xf32>
    %8 = vector.shape_cast %7 : vector<16x32xf32> to vector<1x16x32xf32>
    %c0_6 = arith.constant 0 : index
    %c0_7 = arith.constant 0 : index
    %c0_8 = arith.constant 0 : index
    %9 = vector.load %arg6[%c0_6, %c0_7, %c0_8] : memref<1x16x32xf32, #tpu.memory_space<vmem>>, vector<1x16x32xf32>
    tpu.vector_store %arg6[%c0_6, %c0_7, %c0_8], %8 {strides = array<i32>} : memref<1x16x32xf32, #tpu.memory_space<vmem>>, vector<1x16x32xf32>,
    %c0_i32 = arith.constant 0 : i32
    %10 = arith.index_cast %c0_i32 : i32 to index
    %c0_9 = arith.constant 0 : index
    %c0_10 = arith.constant 0 : index
    %11 = vector.load %arg1[%10, %c0_9, %c0_10] : memref<1x8x32xf32, #tpu.memory_space<vmem>>, vector<1x8x32xf32>
    %12 = vector.shape_cast %11 : vector<1x8x32xf32> to vector<8x32xf32>
    %13 = arith.index_cast %c0_i32 : i32 to index
    %c0_11 = arith.constant 0 : index
    %c0_12 = arith.constant 0 : index
    %14 = vector.load %arg6[%13, %c0_11, %c0_12] : memref<1x16x32xf32, #tpu.memory_space<vmem>>, vector<1x16x32xf32>
    %15 = vector.shape_cast %14 : vector<1x16x32xf32> to vector<16x32xf32>
    %cst_13 = arith.constant dense<0.000000e+00> : vector<8x16xf32>
    %16 = tpu.matmul %12, %15, %cst_13 {dimension_numbers = #tpu.dot_dimension_numbers<[1], [1], [0], [0], [0, 0, 1, 0], [], []>} : vector<8x32xf32>, vector<16x32xf32>, vector<8x16xf32> -> vector<8x16xf32>
    %cst_14 = arith.constant dense<0xFF800000> : vector<8xf32>
    %17 = vector.multi_reduction <maximumf>, %16, %cst_14 [1] : vector<8x16xf32> to vector<8xf32>
    %18 = vector.shape_cast %17 : vector<8xf32> to vector<8x1xf32>
    %cst_15 = arith.constant dense<0xFF800000> : vector<1xf32>
    %19 = vector.multi_reduction <maximumf>, %18, %cst_15 [0] : vector<8x1xf32> to vector<1xf32>
    %20 = vector.shape_cast %19 : vector<1xf32> to vector<1x1xf32>
    %21 = vector.broadcast %20 : vector<1x1xf32> to vector<8x16xf32>
    %22 = arith.subf %16, %21 : vector<8x16xf32>
    %23 = math.exp %22 : vector<8x16xf32>
    %24 = tpu.transpose %23, [1, 0] : vector<8x16xf32> -> vector<16x8xf32>
    %cst_16 = arith.constant dense<0.000000e+00> : vector<16xf32>
    %25 = vector.multi_reduction <add>, %24, %cst_16 [1] : vector<16x8xf32> to vector<16xf32>
    %26 = vector.shape_cast %25 : vector<16xf32> to vector<16x1xf32>
    %cst_17 = arith.constant 1.000000e-30 : f32
    %27 = vector.broadcast %cst_17 : f32 to vector<16x1xf32>
    %28 = arith.addf %26, %27 : vector<16x1xf32>
    %cst_18 = arith.constant 1.000000e+00 : f32
    %29 = vector.broadcast %cst_18 : f32 to vector<16x1xf32>
    %30 = arith.divf %29, %28 : vector<16x1xf32>
    %cst_19 = arith.constant dense<0.000000e+00> : vector<8xf32>
    %31 = vector.multi_reduction <add>, %24, %cst_19 [0] : vector<16x8xf32> to vector<8xf32>
    %32 = vector.shape_cast %31 : vector<8xf32> to vector<1x8xf32>
    %cst_20 = arith.constant 1.000000e-30 : f32
    %33 = vector.broadcast %cst_20 : f32 to vector<1x8xf32>
    %34 = arith.addf %32, %33 : vector<1x8xf32>
    %cst_21 = arith.constant 1.000000e+00 : f32
    %35 = vector.broadcast %cst_21 : f32 to vector<1x8xf32>
    %36 = arith.divf %35, %34 : vector<1x8xf32>
    %37 = vector.broadcast %30 : vector<16x1xf32> to vector<16x32xf32>
    %38 = arith.mulf %15, %37 : vector<16x32xf32>
    %cst_22 = arith.constant dense<0.000000e+00> : vector<8x32xf32>
    %39 = tpu.matmul %23, %38, %cst_22 {dimension_numbers = #tpu.dot_dimension_numbers<[1], [0], [0], [1], [0, 0, 1, 1], [], []>} : vector<8x16xf32>, vector<16x32xf32>, vector<8x32xf32> -> vector<8x32xf32>
    %40 = vector.broadcast %36 : vector<1x8xf32> to vector<16x8xf32>
    %41 = arith.mulf %24, %40 : vector<16x8xf32>
    %42 = tpu.concatenate %12, %39 in 1 : vector<8x32xf32>, vector<8x32xf32> -> vector<8x64xf32>
    %cst_23 = arith.constant dense<0.000000e+00> : vector<16x64xf32>
    %43 = tpu.matmul %41, %42, %cst_23 {dimension_numbers = #tpu.dot_dimension_numbers<[1], [0], [0], [1], [0, 0, 1, 1], [], []>} : vector<16x8xf32>, vector<8x64xf32>, vector<16x64xf32> -> vector<16x64xf32>
    %44 = arith.index_cast %c0_i32 : i32 to index
    %c0_24 = arith.constant 0 : index
    %c0_25 = arith.constant 0 : index
    %45 = vector.load %arg5[%44, %c0_24, %c0_25] : memref<1x16x64xf32, #tpu.memory_space<vmem>>, vector<1x16x64xf32>
    %46 = vector.shape_cast %45 : vector<1x16x64xf32> to vector<16x64xf32>
    %47 = vector.shape_cast %43 : vector<16x64xf32> to vector<1x16x64xf32>
    tpu.vector_store %arg5[%44, %c0_24, %c0_25], %47 {strides = array<i32>} : memref<1x16x64xf32, #tpu.memory_space<vmem>>, vector<1x16x64xf32>,
    %c1_i32 = arith.constant 1 : i32
    return
  }
  func.func @transform_0(%arg0: i32) -> (i32, i32, i32) {
    %c0_i32 = arith.constant 0 : i32
    %c0_i32_0 = arith.constant 0 : i32
    %c0_i32_1 = arith.constant 0 : i32
    return %arg0, %c0_i32, %c0_i32_0 : i32, i32, i32
  }
  func.func @transform_1(%arg0: i32) -> (i32, i32, i32) {
    %c0_i32 = arith.constant 0 : i32
    %c0_i32_0 = arith.constant 0 : i32
    %c0_i32_1 = arith.constant 0 : i32
    return %arg0, %c0_i32, %c0_i32_0 : i32, i32, i32
  }
  func.func @transform_2(%arg0: i32) -> (i32, i32) {
    %c0_i32 = arith.constant 0 : i32
    %c0_i32_0 = arith.constant 0 : i32
    %c0_i32_1 = arith.constant 0 : i32
    return %c0_i32, %c0_i32_0 : i32, i32
  }
  func.func @transform_3(%arg0: i32) -> (i32, i32) {
    %c0_i32 = arith.constant 0 : i32
    %c0_i32_0 = arith.constant 0 : i32
    %c0_i32_1 = arith.constant 0 : i32
    return %c0_i32, %c0_i32_0 : i32, i32
  }
  func.func @transform_4(%arg0: i32) -> (i32, i32, i32) {
    %c0_i32 = arith.constant 0 : i32
    %c0_i32_0 = arith.constant 0 : i32
    %c0_i32_1 = arith.constant 0 : i32
    return %arg0, %c0_i32, %c0_i32_0 : i32, i32, i32
  }
}

</mosaic_0001>

<llo_original>
// kernel: tpu_custom_call.1
$region0: #{tpu_custom_call.1}
  #allocation0 [shape = 'u32[]', space=smem, size = 0x4, offset = 0x4, fixed_abs, tag = 'smem constant byte address 0x4 - core index']
  #allocation1 [shape = 'u32[144,128]{1,0:T(1,128)}', space=vmem, size = 0x12000, scoped, tag = 'internal scratch']
  #allocation2 [shape = 'f32[1,16,32]{2,1,0:T(8,128)}', space=vmem, size = 0x2000, scoped, tag = 'scratch operand']
  %s0 = inlined_call_operand.hbm [shape: f32[2,8,32], index: 0, kind: input, shape index: {}]
  %s1 = inlined_call_operand.hbm [shape: f32[2,16,32], index: 1, kind: input, shape index: {}]
  %s2 = inlined_call_operand.hbm [shape: f32[32,32], index: 2, kind: input, shape index: {}]
  %s3 = inlined_call_operand.vmem [shape: f32[1,32], index: 3, kind: input, shape index: {}]
  %s4 = inlined_call_operand.hbm [shape: f32[2,16,64], index: 4, kind: output, shape index: {}]
  %s5 = sld [smem:[#allocation0]]
  $region61: #{tpu_custom_call.1} parent=0
    _
  %s7 = ssub.s32 1, %s5
  %s8 = scalar_select 0, %s7, %s5
  $region1: #{tpu_custom_call.1} parent=0
    #allocation3 [shape = 'u8[8192]{0}', space=vmem, size = 0x2000, scoped, tag = 'input window, operand 0']
    #allocation4 [shape = 's32[2]{0}', space=sflag, size = 0x8, scoped, tag = 'scoped memory for tpu_custom_call.1']
    #allocation5 [shape = 's32[2]{0}', space=sflag, size = 0x8, scoped, tag = 'scoped memory for tpu_custom_call.1']
    #allocation6 [shape = 'u8[16384]{0}', space=vmem, size = 0x4000, scoped, tag = 'input window, operand 1']
    #allocation7 [shape = 's32[2]{0}', space=sflag, size = 0x8, scoped, tag = 'scoped memory for tpu_custom_call.1']
    #allocation8 [shape = 'u8[16384]{0}', space=vmem, size = 0x4000, scoped, tag = 'input window, operand 2, single buffered']
    #allocation9 [shape = 'u8[16384]{0}', space=vmem, size = 0x4000, scoped, tag = 'output window, operand 0']
    %9 = vsyncpa [#allocation4], 0
    %s10 = scalar_lea.sflag [#allocation4], 1
    %11 = vsyncpa %s10, 0
    %12 = vsyncpa [#allocation7], 0
    %s13 = scalar_lea.sflag [#allocation7], 1
    %14 = vsyncpa %s13, 0
    %15 = vsyncpa [#allocation5], 0
    %s16 = scalar_lea.sflag [#allocation5], 1
    %17 = vsyncpa %s16, 0
    loop: start=0, step=1, limit=4
    $region2: #{tpu_custom_call.1} parent=1 // loop_pre_header
      _
    $region3: #{tpu_custom_call.1} parent=1 // loop_header
      %s19 = sphi 0, %s23
      %p20 = scmp.ge.s32.totalorder %s19, 4
      %s29 = sphi 0, %s31
      %s32 = sphi 0, %s29
      %s33 = sphi 0, %s32
      %s49 = sphi 0, %s33
      %s55 = sphi 0, %s57
      %s58 = sphi 0, %s55
      %s59 = sphi 0, %s58
      %s75 = sphi 0, %s59
      %s79 = sphi 0, %s79
      %s81 = sphi 0, %s79
      %s82 = sphi 0, %s81
      %s96 = sphi 0, %s82
      %s100 = sphi 0, %s100
      %s102 = sphi 0, %s100
      %s103 = sphi 0, %s102
      %s117 = sphi 0, %s103
      %s123 = sphi 0, %s125
      %s126 = sphi 0, %s123
      %s127 = sphi 0, %s126
      %s143 = sphi 0, %s127
    $region4: #{tpu_custom_call.1} parent=1 // loop_header_branch
      %22 = sbr.rel (%p20) target = $region8
    $region5: #{tpu_custom_call.1} parent=1 // loop_body
      %s24 = ssub.s32 %s19, 1
      %s25 = ssub.s32 %s19, 2
      %s26 = sadd.s32 %s19, 1
      %s27 = ssub.s32 %s19, %s26
      %p28 = scmp.eq.s32.totalorder %s27, 0
      %s30 = sadd.s32 %s29, 1
      %s31 = scalar_select %p28, %s29, %s30
      %p34 = pneg %p28
      %p35 = scmp.eq.s32.totalorder %s19, 1
      %p36 = por %p34, %p35
      %p37 = scmp.ne.s32.totalorder %s29, %s32
      %p38 = scmp.eq.s32.totalorder %s19, 0
      %p39 = por %p37, %p38
      %p40 = scmp.ne.s32.totalorder %s29, %s32
      %p41 = scmp.eq.s32.totalorder %s24, 1
      %p42 = por %p40, %p41
      %p43 = scmp.ne.s32.totalorder %s32, %s33
      %p44 = scmp.eq.s32.totalorder %s24, 0
      %p45 = por %p43, %p44
      %p46 = scmp.ne.s32.totalorder %s32, %s33
      %p47 = scmp.eq.s32.totalorder %s25, 1
      %p48 = por %p46, %p47
      %p50 = scmp.ne.s32.totalorder %s33, %s49
      %p51 = scmp.eq.s32.totalorder %s25, 0
      %p52 = por %p50, %p51
      %s53 = ssub.s32 %s19, %s26
      %p54 = scmp.eq.s32.totalorder %s53, 0
      %s56 = sadd.s32 %s55, 1
      %s57 = scalar_select %p54, %s55, %s56
      %p60 = pneg %p54
      %p61 = scmp.eq.s32.totalorder %s19, 1
      %p62 = por %p60, %p61
      %p63 = scmp.ne.s32.totalorder %s55, %s58
      %p64 = scmp.eq.s32.totalorder %s19, 0
      %p65 = por %p63, %p64
      %p66 = scmp.ne.s32.totalorder %s55, %s58
      %p67 = scmp.eq.s32.totalorder %s24, 1
      %p68 = por %p66, %p67
      %p69 = scmp.ne.s32.totalorder %s58, %s59
      %p70 = scmp.eq.s32.totalorder %s24, 0
      %p71 = por %p69, %p70
      %p72 = scmp.ne.s32.totalorder %s58, %s59
      %p73 = scmp.eq.s32.totalorder %s25, 1
      %p74 = por %p72, %p73
      %p76 = scmp.ne.s32.totalorder %s59, %s75
      %p77 = scmp.eq.s32.totalorder %s25, 0
      %p78 = por %p76, %p77
      %s80 = sadd.s32 %s79, 1
      %p83 = scmp.eq.s32.totalorder %s19, 1
      %p84 = scmp.ne.s32.totalorder %s79, %s81
      %p85 = scmp.eq.s32.totalorder %s19, 0
      %p86 = por %p84, %p85
      %p87 = scmp.ne.s32.totalorder %s79, %s81
      %p88 = scmp.eq.s32.totalorder %s24, 1
      %p89 = por %p87, %p88
      %p90 = scmp.ne.s32.totalorder %s81, %s82
      %p91 = scmp.eq.s32.totalorder %s24, 0
      %p92 = por %p90, %p91
      %p93 = scmp.ne.s32.totalorder %s81, %s82
      %p94 = scmp.eq.s32.totalorder %s25, 1
      %p95 = por %p93, %p94
      %p97 = scmp.ne.s32.totalorder %s82, %s96
      %p98 = scmp.eq.s32.totalorder %s25, 0
      %p99 = por %p97, %p98
      %s101 = sadd.s32 %s100, 1
      %p104 = scmp.eq.s32.totalorder %s19, 1
      %p105 = scmp.ne.s32.totalorder %s100, %s102
      %p106 = scmp.eq.s32.totalorder %s19, 0
      %p107 = por %p105, %p106
      %p108 = scmp.ne.s32.totalorder %s100, %s102
      %p109 = scmp.eq.s32.totalorder %s24, 1
      %p110 = por %p108, %p109
      %p111 = scmp.ne.s32.totalorder %s102, %s103
      %p112 = scmp.eq.s32.totalorder %s24, 0
      %p113 = por %p111, %p112
      %p114 = scmp.ne.s32.totalorder %s102, %s103
      %p115 = scmp.eq.s32.totalorder %s25, 1
      %p116 = por %p114, %p115
      %p118 = scmp.ne.s32.totalorder %s103, %s117
      %p119 = scmp.eq.s32.totalorder %s25, 0
      %p120 = por %p118, %p119
      %s121 = ssub.s32 %s19, %s26
      %p122 = scmp.eq.s32.totalorder %s121, 0
      %s124 = sadd.s32 %s123, 1
      %s125 = scalar_select %p122, %s123, %s124
      %p128 = pneg %p122
      %p129 = scmp.eq.s32.totalorder %s19, 1
      %p130 = por %p128, %p129
      %p131 = scmp.ne.s32.totalorder %s123, %s126
      %p132 = scmp.eq.s32.totalorder %s19, 0
      %p133 = por %p131, %p132
      %p134 = scmp.ne.s32.totalorder %s123, %s126
      %p135 = scmp.eq.s32.totalorder %s24, 1
      %p136 = por %p134, %p135
      %p137 = scmp.ne.s32.totalorder %s126, %s127
      %p138 = scmp.eq.s32.totalorder %s24, 0
      %p139 = por %p137, %p138
      %p140 = scmp.ne.s32.totalorder %s126, %s127
      %p141 = scmp.eq.s32.totalorder %s25, 1
      %p142 = por %p140, %p141
      %p144 = scmp.ne.s32.totalorder %s127, %s143
      %p145 = scmp.eq.s32.totalorder %s25, 0
      %p146 = por %p144, %p145
      %p147 = scmp.le.s32.totalorder 1, %s19
      %p148 = scmp.lt.s32.totalorder %s19, 3
      %p149 = pnand %p147, %p148
      %p150 = pneg %p149
      // Predicated region
      $region9: #{tpu_custom_call.1} parent=5 // pred_check
        _
      $region10: #{tpu_custom_call.1} parent=5 // pred_check_branch
        %152 = sbr.rel (%p149) target = $region12
      $region11: #{tpu_custom_call.1} parent=5 // pred_region
        %s153 = ssub.s32 %s19, 1
        // Predicated region
        $region13: #{tpu_custom_call.1} parent=11 // pred_check
          %p154 = pneg %p92
        $region14: #{tpu_custom_call.1} parent=11 // pred_check_branch
          %156 = sbr.rel (%p154) target = $region16
        $region15: #{tpu_custom_call.1} parent=11 // pred_region
          %s158 = ssub.s32 512, 512
          %159 = vsyncadd [#allocation7], %s158
          %s160 = sshll.u32 [#allocation8], 4
          %s161 = int_to_ptr.vmem [resolvable:$true] %s160
          %166 = dma.hbm_to_vmem [thread:$0]  %s2, 512, %s161, [#allocation7], 128, 128, 8
        $region16: #{tpu_custom_call.1} parent=11 // pred_fallthru
          _
        // Predicated region
        $region17: #{tpu_custom_call.1} parent=11 // pred_check
          %p167 = pneg %p113
        $region18: #{tpu_custom_call.1} parent=11 // pred_check_branch
          %169 = sbr.rel (%p167) target = $region20
        $region19: #{tpu_custom_call.1} parent=11 // pred_region
          _
        $region20: #{tpu_custom_call.1} parent=11 // pred_fallthru
          _
      $region12: #{tpu_custom_call.1} parent=5 // pred_fallthru
        _
      %p170 = scmp.lt.s32.totalorder %s19, 2
      // Predicated region
      $region21: #{tpu_custom_call.1} parent=5 // pred_check
        %p171 = pneg %p170
      $region22: #{tpu_custom_call.1} parent=5 // pred_check_branch
        %173 = sbr.rel (%p171) target = $region24
      $region23: #{tpu_custom_call.1} parent=5 // pred_region
        // Predicated region
        $region25: #{tpu_custom_call.1} parent=23 // pred_check
          %p174 = pneg %p39
        $region26: #{tpu_custom_call.1} parent=23 // pred_check_branch
          %176 = sbr.rel (%p174) target = $region28
        $region27: #{tpu_custom_call.1} parent=23 // pred_region
          %s177 = sand.u32 %s29, 1
          %s178 = scalar_lea.sflag [#allocation4], %s177
          %s179 = sand.u32 %s29, 1
          %s180 = smul.addr %s179, 8
          %s181 = scalar_lea.vmem [#allocation3], %s180
          %s183 = ssub.s32 128, 128
          %184 = vsyncadd %s178, %s183
          %s185 = smul.addr %s19, 128
          %s186 = scalar_lea.hbm %s0, %s185
          %s188 = sshll.u32 %s181, 4
          %s189 = int_to_ptr.vmem [resolvable:$true] %s188
          %191 = dma.hbm_to_vmem [thread:$0]  %s186, 128, %s189, %s178
        $region28: #{tpu_custom_call.1} parent=23 // pred_fallthru
          _
        // Predicated region
        $region29: #{tpu_custom_call.1} parent=23 // pred_check
          %p192 = pneg %p65
        $region30: #{tpu_custom_call.1} parent=23 // pred_check_branch
          %194 = sbr.rel (%p192) target = $region32
        $region31: #{tpu_custom_call.1} parent=23 // pred_region
          %s195 = sand.u32 %s19, 1
          %s196 = scalar_lea.sflag [#allocation7], %s195
          %s197 = sand.u32 %s55, 1
          %s198 = smul.addr %s197, 16
          %s199 = scalar_lea.vmem [#allocation6], %s198
          %s201 = ssub.s32 256, 256
          %202 = vsyncadd %s196, %s201
          %s203 = smul.addr %s19, 2
          %s204 = smul.addr %s203, 128
          %s205 = scalar_lea.hbm %s1, %s204
          %s206 = sshll.u32 %s199, 4
          %s207 = int_to_ptr.vmem [resolvable:$true] %s206
          %212 = dma.hbm_to_vmem [thread:$0]  %s205, 256, %s207, %s196, 128, 128, 8
        $region32: #{tpu_custom_call.1} parent=23 // pred_fallthru
          _
      $region24: #{tpu_custom_call.1} parent=5 // pred_fallthru
        _
      %p213 = scmp.le.s32.totalorder 1, %s19
      %p214 = scmp.lt.s32.totalorder %s19, 3
      %p215 = pnand %p213, %p214
      %p216 = pneg %p215
      // Predicated region
      $region33: #{tpu_custom_call.1} parent=5 // pred_check
        _
      $region34: #{tpu_custom_call.1} parent=5 // pred_check_branch
        %218 = sbr.rel (%p215) target = $region36
      $region35: #{tpu_custom_call.1} parent=5 // pred_region
        %s219 = ssub.s32 %s19, 1
        %s220 = sand.u32 %s32, 1
        %s221 = scalar_lea.sflag [#allocation4], %s220
        %s222 = sand.u32 %s32, 1
        %s223 = smul.addr %s222, 8
        %s224 = scalar_lea.vmem [#allocation3], %s223
        // Predicated region
        $region37: #{tpu_custom_call.1} parent=35 // pred_check
          %p225 = pneg %p45
        $region38: #{tpu_custom_call.1} parent=35 // pred_check_branch
          %227 = sbr.rel (%p225) target = $region40
        $region39: #{tpu_custom_call.1} parent=35 // pred_region
          %228 = dma.done %s221, 128
        $region40: #{tpu_custom_call.1} parent=35 // pred_fallthru
          _
        %s229 = sand.u32 %s24, 1
        %s230 = scalar_lea.sflag [#allocation7], %s229
        %s231 = sand.u32 %s58, 1
        %s232 = smul.addr %s231, 16
        %s233 = scalar_lea.vmem [#allocation6], %s232
        // Predicated region
        $region41: #{tpu_custom_call.1} parent=35 // pred_check
          %p234 = pneg %p71
        $region42: #{tpu_custom_call.1} parent=35 // pred_check_branch
          %236 = sbr.rel (%p234) target = $region44
        $region43: #{tpu_custom_call.1} parent=35 // pred_region
          %237 = dma.done %s230, 256
        $region44: #{tpu_custom_call.1} parent=35 // pred_fallthru
          _
        // Predicated region
        $region45: #{tpu_custom_call.1} parent=35 // pred_check
          %p238 = pneg %p92
        $region46: #{tpu_custom_call.1} parent=35 // pred_check_branch
          %240 = sbr.rel (%p238) target = $region48
        $region47: #{tpu_custom_call.1} parent=35 // pred_region
          %241 = dma.done [#allocation7], 512
        $region48: #{tpu_custom_call.1} parent=35 // pred_fallthru
          _
        %s242 = sand.u32 %s32, 1
        %s243 = scalar_lea.sflag [#allocation4], %s242
        %s244 = sand.u32 %s32, 1
        %s245 = smul.addr %s244, 8
        %s246 = scalar_lea.vmem [#allocation3], %s245
        %p247 = pneg %p45
        %p248 = pneg %p42
        %s249 = sand.u32 %s24, 1
        %s250 = scalar_lea.sflag [#allocation7], %s249
        %s251 = sand.u32 %s58, 1
        %s252 = smul.addr %s251, 16
        %s253 = scalar_lea.vmem [#allocation6], %s252
        %p254 = pneg %p71
        %p255 = pneg %p68
        %p256 = pneg %p92
        %p257 = pneg %p89
        %p258 = pneg %p113
        %p259 = pneg %p110
        %p260 = pneg %p139
        %p261 = pneg %p136
        %s262 = sand.u32 %s126, 1
        %s263 = scalar_lea.sflag [#allocation5], %s262
        %s264 = sand.u32 %s126, 1
        %s265 = smul.addr %s264, 16
        %s266 = scalar_lea.vmem [#allocation9], %s265
        %v267 = vld [vmem:[#allocation8] sm:$0xff]
        %v268 = vld [vmem:[#allocation8 + $0x8] sm:$0xff]
        %v269 = vld [vmem:[#allocation8 + $0x10] sm:$0xff]
        %v270 = vld [vmem:[#allocation8 + $0x18] sm:$0xff]
        %v271 = vld [vmem:[%s3] sm:$0x1]
        %v272 = vld [vmem:[%s233] sm:$0xff]
        %v273 = vld [vmem:[%s233 + $0x8] sm:$0xff]
        %v275 = vlaneseq
        %v276 = vshrl.u32 %v275, 7
        %v277 = vsub.s32 0, %v276
        %v278 = vrot.slane %v271, %v277
        %vm280 = vcmask 261120
        %v282 = vsel %vm280, %v272, 0
        %v285 = vsel %vm280, %v273, 0
        %287 = vmatprep.subr.mxu0 0.0
        %288 = vmatpush1.msra.mxu0 %v267
        %289 = vmatprep.subr.mxu0 0.0
        %290 = vmatpush1.msra.mxu0 %v268
        %291 = vmatprep.subr.mxu0 0.0
        %292 = vmatpush1.msra.mxu0 %v269
        %293 = vmatprep.subr.mxu0 0.0
        %294 = vmatpush1.msra.mxu0 %v270
        %295 = vmatprep.subr.mxu0 0.0
        %296 = vmatpush1.msra.mxu0 0.0
        %297 = vmatprep.subr.mxu0 0.0
        %298 = vmatpush1.msra.mxu0 0.0
        %299 = vmatprep.subr.mxu0 0.0
        %300 = vmatpush1.msra.mxu0 0.0
        %301 = vmatprep.subr.mxu0 0.0
        %302 = vmatpush1.msra.mxu0 0.0
        %303 = vmatprep.subr.mxu0 0.0
        %304 = vmatpush1.msra.mxu0 0.0
        %305 = vmatprep.subr.mxu0 0.0
        %306 = vmatpush1.msra.mxu0 0.0
        %307 = vmatprep.subr.mxu0 0.0
        %308 = vmatpush1.msra.mxu0 0.0
        %309 = vmatprep.subr.mxu0 0.0
        %310 = vmatpush1.msra.mxu0 0.0
        %311 = vmatprep.subr.mxu0 0.0
        %312 = vmatpush1.msra.mxu0 0.0
        %313 = vmatprep.subr.mxu0 0.0
        %314 = vmatpush1.msra.mxu0 0.0
        %315 = vmatprep.subr.mxu0 0.0
        %316 = vmatpush1.msra.mxu0 0.0
        %317 = vmatprep.subr.mxu0 0.0
        %318 = vmatpush1.msra.mxu0 0.0
        %319 = vmatprep.subr.mxu0 0.0
        %320 = vmatpush1.msra.mxu0 0.0
        %321 = vmatprep.subr.mxu0 0.0
        %322 = vmatpush1.msra.mxu0 0.0
        %323 = vmatprep.subr.mxu0 0.0
        %324 = vmatpush1.msra.mxu0 0.0
        %325 = vmatprep.subr.mxu0 0.0
        %326 = vmatpush1.msra.mxu0 0.0
        %327 = vmatprep.subr.mxu0 0.0
        %328 = vmatpush1.msra.mxu0 0.0
        %329 = vmatprep.subr.mxu0 0.0
        %330 = vmatpush1.msra.mxu0 0.0
        %331 = vmatprep.subr.mxu0 0.0
        %332 = vmatpush1.msra.mxu0 0.0
        %333 = vmatprep.subr.mxu0 0.0
        %334 = vmatpush1.msra.mxu0 0.0
        %335 = vmatprep.subr.mxu0 0.0
        %336 = vmatpush1.msra.mxu0 0.0
        %337 = vmatprep.subr.mxu0 0.0
        %338 = vmatpush1.msra.mxu0 0.0
        %339 = vmatprep.subr.mxu0 0.0
        %340 = vmatpush1.msra.mxu0 0.0
        %341 = vmatprep.subr.mxu0 0.0
        %342 = vmatpush1.msra.mxu0 0.0
        %343 = vmatprep.subr.mxu0 0.0
        %344 = vmatpush1.msra.mxu0 0.0
        %345 = vmatprep.subr.mxu0 0.0
        %346 = vmatpush1.msra.mxu0 0.0
        %347 = vmatprep.subr.mxu0 0.0
        %348 = vmatpush1.msra.mxu0 0.0
        %349 = vmatprep.subr.mxu0 0.0
        %350 = vmatpush1.msra.mxu0 0.0
        %351 = vmatprep.mubr.f32.mxu0 0.0
        %352 = vmatmul.mubr.f32.gmra.mrb[0].mxu0 %v282
        %v353 = vpop.f32.mrb[0].mxu0
        %v354 = vadd.f32 %v278, %v353
        %v355 = vpop.f32.mrb[0].mxu0
        %356 = vmatprep.mubr.f32.mxu0 0.0
        %357 = vmatmul.mubr.f32.gmra.mrb[0].mxu0 %v285
        %v358 = vpop.f32.mrb[0].mxu0
        %v359 = vadd.f32 %v278, %v358
        %v360 = vpop.f32.mrb[0].mxu0
        %361 = vdwg.mxu0
        %v362 = vtanh.pop %v354
        %v363 = vtanh.pop %v359
        %364 = vst.msk [vmem:[#allocation2] sm:$0xff] %vm280, %v362
        %365 = vst.msk [vmem:[#allocation2 + $0x8] sm:$0xff] %vm280, %v363
        %v366 = vld [vmem:[%s224] sm:$0xff]
        %v367 = vld [vmem:[#allocation2] sm:$0xff]
        %v368 = vld [vmem:[#allocation2 + $0x8] sm:$0xff]
        %v370 = vsel %vm280, %v366, 0
        %v373 = vsel %vm280, %v367, 0
        %v376 = vsel %vm280, %v368, 0
        %378 = vmatprep.subr.mxu0 0.0
        %379 = vmatpush1.xpose.msra.mxu0 %v373
        %380 = vmatprep.subr.mxu0 0.0
        %381 = vmatpush1.xpose.msra.mxu0 %v376
        %382 = vmatprep.subr.mxu0 0.0
        %383 = vmatpush1.xpose.msra.mxu0 0.0
        %384 = vmatprep.subr.mxu0 0.0
        %385 = vmatpush1.xpose.msra.mxu0 0.0
        %386 = vmatprep.subr.mxu0 0.0
        %387 = vmatpush1.xpose.msra.mxu0 0.0
        %388 = vmatprep.subr.mxu0 0.0
        %389 = vmatpush1.xpose.msra.mxu0 0.0
        %390 = vmatprep.subr.mxu0 0.0
        %391 = vmatpush1.xpose.msra.mxu0 0.0
        %392 = vmatprep.subr.mxu0 0.0
        %393 = vmatpush1.xpose.msra.mxu0 0.0
        %394 = vmatprep.subr.mxu0 0.0
        %395 = vmatpush1.xpose.msra.mxu0 0.0
        %396 = vmatprep.subr.mxu0 0.0
        %397 = vmatpush1.xpose.msra.mxu0 0.0
        %398 = vmatprep.subr.mxu0 0.0
        %399 = vmatpush1.xpose.msra.mxu0 0.0
        %400 = vmatprep.subr.mxu0 0.0
        %401 = vmatpush1.xpose.msra.mxu0 0.0
        %402 = vmatprep.subr.mxu0 0.0
        %403 = vmatpush1.xpose.msra.mxu0 0.0
        %404 = vmatprep.subr.mxu0 0.0
        %405 = vmatpush1.xpose.msra.mxu0 0.0
        %406 = vmatprep.subr.mxu0 0.0
        %407 = vmatpush1.xpose.msra.mxu0 0.0
        %408 = vmatprep.subr.mxu0 0.0
        %409 = vmatpush1.xpose.msra.mxu0 0.0
        %410 = vmatprep.subr.mxu0 0.0
        %411 = vmatpush1.xpose.msra.mxu0 0.0
        %412 = vmatprep.subr.mxu0 0.0
        %413 = vmatpush1.xpose.msra.mxu0 0.0
        %414 = vmatprep.subr.mxu0 0.0
        %415 = vmatpush1.xpose.msra.mxu0 0.0
        %416 = vmatprep.subr.mxu0 0.0
        %417 = vmatpush1.xpose.msra.mxu0 0.0
        %418 = vmatprep.subr.mxu0 0.0
        %419 = vmatpush1.xpose.msra.mxu0 0.0
        %420 = vmatprep.subr.mxu0 0.0
        %421 = vmatpush1.xpose.msra.mxu0 0.0
        %422 = vmatprep.subr.mxu0 0.0
        %423 = vmatpush1.xpose.msra.mxu0 0.0
        %424 = vmatprep.subr.mxu0 0.0
        %425 = vmatpush1.xpose.msra.mxu0 0.0
        %426 = vmatprep.subr.mxu0 0.0
        %427 = vmatpush1.xpose.msra.mxu0 0.0
        %428 = vmatprep.subr.mxu0 0.0
        %429 = vmatpush1.xpose.msra.mxu0 0.0
        %430 = vmatprep.subr.mxu0 0.0
        %431 = vmatpush1.xpose.msra.mxu0 0.0
        %432 = vmatprep.subr.mxu0 0.0
        %433 = vmatpush1.xpose.msra.mxu0 0.0
        %434 = vmatprep.subr.mxu0 0.0
        %435 = vmatpush1.xpose.msra.mxu0 0.0
        %436 = vmatprep.subr.mxu0 0.0
        %437 = vmatpush1.xpose.msra.mxu0 0.0
        %438 = vmatprep.subr.mxu0 0.0
        %439 = vmatpush1.xpose.msra.mxu0 0.0
        %440 = vmatprep.subr.mxu0 0.0
        %441 = vmatpush1.xpose.msra.mxu0 0.0
        %442 = vmatprep.mubr.f32.mxu0 0.0
        %443 = vmatmul.mubr.f32.gmra.mrb[0].mxu0 %v370
        %v444 = vpop.f32.mrb[0].mxu0
        %v445 = vadd.f32 0.0, %v444
        %v446 = vpop.f32.mrb[0].mxu0
        %447 = vdwg.mxu0
        %vm448 = vcmask 130048
        %v449 = vsel %vm448, %v445, -inf
        %450 = vmax.xlane.f32.xlu0 %v449
        %v451 = vpop.xlane.xlu0 %450
        %v452 = vrot.slane %v451, 4
        %v453 = vmax.f32 %v451, %v452
        %v454 = vrot.slane %v453, 2
        %v455 = vmax.f32 %v453, %v454
        %v456 = vrot.slane %v455, 1
        %v457 = vmax.f32 %v455, %v456
        %v458 = vsub.f32 %v445, %v457
        %v459 = vmul.f32 %v458, 1.442695
        %v460 = vpow.pop %v459
        %461 = vxpose.xlu0.b32.start [1/16] %v460, 128
        %462 = vxpose.xlu0.b32.cont [2/16] 0.0, 128
        %463 = vxpose.xlu0.b32.cont [3/16] 0.0, 128
        %464 = vxpose.xlu0.b32.cont [4/16] 0.0, 128
        %465 = vxpose.xlu0.b32.cont [5/16] 0.0, 128
        %466 = vxpose.xlu0.b32.cont [6/16] 0.0, 128
        %467 = vxpose.xlu0.b32.cont [7/16] 0.0, 128
        %468 = vxpose.xlu0.b32.cont [8/16] 0.0, 128
        %469 = vxpose.xlu0.b32.cont [9/16] 0.0, 128
        %470 = vxpose.xlu0.b32.cont [10/16] 0.0, 128
        %471 = vxpose.xlu0.b32.cont [11/16] 0.0, 128
        %472 = vxpose.xlu0.b32.cont [12/16] 0.0, 128
        %473 = vxpose.xlu0.b32.cont [13/16] 0.0, 128
        %474 = vxpose.xlu0.b32.cont [14/16] 0.0, 128
        %475 = vxpose.xlu0.b32.cont [15/16] 0.0, 128
        %476 = vxpose.xlu0.b32.end [16/16] 0.0, 128
        %v477 = vpop.trf.xlu0
        %v478 = vpop.trf.xlu0
        %v479 = vpop.trf.xlu0
        %v480 = vpop.trf.xlu0
        %v481 = vpop.trf.xlu0
        %v482 = vpop.trf.xlu0
        %v483 = vpop.trf.xlu0
        %v484 = vpop.trf.xlu0
        %v485 = vpop.trf.xlu0
        %v486 = vpop.trf.xlu0
        %v487 = vpop.trf.xlu0
        %v488 = vpop.trf.xlu0
        %v489 = vpop.trf.xlu0
        %v490 = vpop.trf.xlu0
        %v491 = vpop.trf.xlu0
        %v492 = vpop.trf.xlu0
        %vm493 = vcmask 64512
        %v494 = vsel %vm493, %v477, 0.0
        %495 = vadd.xlane.f32.xlu0 %v494
        %v496 = vpop.xlane.xlu0 %495
        %v497 = vsel %vm493, %v478, 0.0
        %498 = vadd.xlane.f32.xlu0 %v497
        %v499 = vpop.xlane.xlu0 %498
        %v500 = vadd.f32 %v496, 1e-30
        %v501 = vadd.f32 %v499, 1e-30
        %v502 = vrcp.pop %v500
        %v503 = vmul.f32 1.0, %v502
        %v504 = vrcp.pop %v501
        %v505 = vmul.f32 1.0, %v504
        %v506 = vadd.f32 %v494, %v497
        %v507 = vrot.slane %v506, 4
        %v508 = vadd.f32 %v506, %v507
        %v509 = vrot.slane %v508, 2
        %v510 = vadd.f32 %v508, %v509
        %v511 = vrot.slane %v510, 1
        %v512 = vadd.f32 %v510, %v511
        %v513 = vadd.f32 %v512, 1e-30
        %v514 = vrcp.pop %v513
        %v515 = vmul.f32 1.0, %v514
        %v516 = vmul.f32 %v367, %v503
        %v517 = vmul.f32 %v368, %v505
        %v519 = vsel %vm448, %v460, 0
        %521 = vmatprep.subr.mxu0 0.0
        %522 = vmatpush1.msra.mxu0 %v516
        %523 = vmatprep.subr.mxu0 0.0
        %524 = vmatpush1.msra.mxu0 %v517
        %525 = vmatprep.subr.mxu0 0.0
        %526 = vmatpush1.msra.mxu0 0.0
        %527 = vmatprep.subr.mxu0 0.0
        %528 = vmatpush1.msra.mxu0 0.0
        %529 = vmatprep.subr.mxu0 0.0
        %530 = vmatpush1.msra.mxu0 0.0
        %531 = vmatprep.subr.mxu0 0.0
        %532 = vmatpush1.msra.mxu0 0.0
        %533 = vmatprep.subr.mxu0 0.0
        %534 = vmatpush1.msra.mxu0 0.0
        %535 = vmatprep.subr.mxu0 0.0
        %536 = vmatpush1.msra.mxu0 0.0
        %537 = vmatprep.subr.mxu0 0.0
        %538 = vmatpush1.msra.mxu0 0.0
        %539 = vmatprep.subr.mxu0 0.0
        %540 = vmatpush1.msra.mxu0 0.0
        %541 = vmatprep.subr.mxu0 0.0
        %542 = vmatpush1.msra.mxu0 0.0
        %543 = vmatprep.subr.mxu0 0.0
        %544 = vmatpush1.msra.mxu0 0.0
        %545 = vmatprep.subr.mxu0 0.0
        %546 = vmatpush1.msra.mxu0 0.0
        %547 = vmatprep.subr.mxu0 0.0
        %548 = vmatpush1.msra.mxu0 0.0
        %549 = vmatprep.subr.mxu0 0.0
        %550 = vmatpush1.msra.mxu0 0.0
        %551 = vmatprep.subr.mxu0 0.0
        %552 = vmatpush1.msra.mxu0 0.0
        %553 = vmatprep.subr.mxu0 0.0
        %554 = vmatpush1.msra.mxu0 0.0
        %555 = vmatprep.subr.mxu0 0.0
        %556 = vmatpush1.msra.mxu0 0.0
        %557 = vmatprep.subr.mxu0 0.0
        %558 = vmatpush1.msra.mxu0 0.0
        %559 = vmatprep.subr.mxu0 0.0
        %560 = vmatpush1.msra.mxu0 0.0
        %561 = vmatprep.subr.mxu0 0.0
        %562 = vmatpush1.msra.mxu0 0.0
        %563 = vmatprep.subr.mxu0 0.0
        %564 = vmatpush1.msra.mxu0 0.0
        %565 = vmatprep.subr.mxu0 0.0
        %566 = vmatpush1.msra.mxu0 0.0
        %567 = vmatprep.subr.mxu0 0.0
        %568 = vmatpush1.msra.mxu0 0.0
        %569 = vmatprep.subr.mxu0 0.0
        %570 = vmatpush1.msra.mxu0 0.0
        %571 = vmatprep.subr.mxu0 0.0
        %572 = vmatpush1.msra.mxu0 0.0
        %573 = vmatprep.subr.mxu0 0.0
        %574 = vmatpush1.msra.mxu0 0.0
        %575 = vmatprep.subr.mxu0 0.0
        %576 = vmatpush1.msra.mxu0 0.0
        %577 = vmatprep.subr.mxu0 0.0
        %578 = vmatpush1.msra.mxu0 0.0
        %579 = vmatprep.subr.mxu0 0.0
        %580 = vmatpush1.msra.mxu0 0.0
        %581 = vmatprep.subr.mxu0 0.0
        %582 = vmatpush1.msra.mxu0 0.0
        %583 = vmatprep.subr.mxu0 0.0
        %584 = vmatpush1.msra.mxu0 0.0
        %585 = vmatprep.mubr.f32.mxu0 0.0
        %586 = vmatmul.mubr.f32.gmra.mrb[0].mxu0 %v519
        %v587 = vpop.f32.mrb[0].mxu0
        %v588 = vadd.f32 0.0, %v587
        %v589 = vpop.f32.mrb[0].mxu0
        %590 = vdwg.mxu0
        %v591 = vmul.f32 %v477, %v515
        %v592 = vmul.f32 %v478, %v515
        %594 = vrot.lane.b32.xlu0 %v588, 32
        %v595 = vpop.permute.xlu0 %594
        %v597 = vsel %vm280, %v366, %v595
        %v599 = vsel %vm493, %v591, 0
        %v602 = vsel %vm493, %v592, 0
        %604 = vmatprep.subr.mxu0 0.0
        %605 = vmatpush1.msra.mxu0 %v597
        %606 = vmatprep.subr.mxu0 0.0
        %607 = vmatpush1.msra.mxu0 0.0
        %608 = vmatprep.subr.mxu0 0.0
        %609 = vmatpush1.msra.mxu0 0.0
        %610 = vmatprep.subr.mxu0 0.0
        %611 = vmatpush1.msra.mxu0 0.0
        %612 = vmatprep.subr.mxu0 0.0
        %613 = vmatpush1.msra.mxu0 0.0
        %614 = vmatprep.subr.mxu0 0.0
        %615 = vmatpush1.msra.mxu0 0.0
        %616 = vmatprep.subr.mxu0 0.0
        %617 = vmatpush1.msra.mxu0 0.0
        %618 = vmatprep.subr.mxu0 0.0
        %619 = vmatpush1.msra.mxu0 0.0
        %620 = vmatprep.subr.mxu0 0.0
        %621 = vmatpush1.msra.mxu0 0.0
        %622 = vmatprep.subr.mxu0 0.0
        %623 = vmatpush1.msra.mxu0 0.0
        %624 = vmatprep.subr.mxu0 0.0
        %625 = vmatpush1.msra.mxu0 0.0
        %626 = vmatprep.subr.mxu0 0.0
        %627 = vmatpush1.msra.mxu0 0.0
        %628 = vmatprep.subr.mxu0 0.0
        %629 = vmatpush1.msra.mxu0 0.0
        %630 = vmatprep.subr.mxu0 0.0
        %631 = vmatpush1.msra.mxu0 0.0
        %632 = vmatprep.subr.mxu0 0.0
        %633 = vmatpush1.msra.mxu0 0.0
        %634 = vmatprep.subr.mxu0 0.0
        %635 = vmatpush1.msra.mxu0 0.0
        %636 = vmatprep.subr.mxu0 0.0
        %637 = vmatpush1.msra.mxu0 0.0
        %638 = vmatprep.subr.mxu0 0.0
        %639 = vmatpush1.msra.mxu0 0.0
        %640 = vmatprep.subr.mxu0 0.0
        %641 = vmatpush1.msra.mxu0 0.0
        %642 = vmatprep.subr.mxu0 0.0
        %643 = vmatpush1.msra.mxu0 0.0
        %644 = vmatprep.subr.mxu0 0.0
        %645 = vmatpush1.msra.mxu0 0.0
        %646 = vmatprep.subr.mxu0 0.0
        %647 = vmatpush1.msra.mxu0 0.0
        %648 = vmatprep.subr.mxu0 0.0
        %649 = vmatpush1.msra.mxu0 0.0
        %650 = vmatprep.subr.mxu0 0.0
        %651 = vmatpush1.msra.mxu0 0.0
        %652 = vmatprep.subr.mxu0 0.0
        %653 = vmatpush1.msra.mxu0 0.0
        %654 = vmatprep.subr.mxu0 0.0
        %655 = vmatpush1.msra.mxu0 0.0
        %656 = vmatprep.subr.mxu0 0.0
        %657 = vmatpush1.msra.mxu0 0.0
        %658 = vmatprep.subr.mxu0 0.0
        %659 = vmatpush1.msra.mxu0 0.0
        %660 = vmatprep.subr.mxu0 0.0
        %661 = vmatpush1.msra.mxu0 0.0
        %662 = vmatprep.subr.mxu0 0.0
        %663 = vmatpush1.msra.mxu0 0.0
        %664 = vmatprep.subr.mxu0 0.0
        %665 = vmatpush1.msra.mxu0 0.0
        %666 = vmatprep.subr.mxu0 0.0
        %667 = vmatpush1.msra.mxu0 0.0
        %668 = vmatprep.mubr.f32.mxu0 0.0
        %669 = vmatmul.mubr.f32.gmra.mrb[0].mxu0 %v599
        %v670 = vpop.f32.mrb[0].mxu0
        %v671 = vadd.f32 0.0, %v670
        %v672 = vpop.f32.mrb[0].mxu0
        %673 = vmatprep.mubr.f32.mxu0 0.0
        %674 = vmatmul.mubr.f32.gmra.mrb[0].mxu0 %v602
        %v675 = vpop.f32.mrb[0].mxu0
        %v676 = vadd.f32 0.0, %v675
        %v677 = vpop.f32.mrb[0].mxu0
        %678 = vdwg.mxu0
        %vm679 = vcmask 523264
        %680 = vst.msk [vmem:[%s266] sm:$0xff] %vm679, %v671
        %681 = vst.msk [vmem:[%s266 + $0x8] sm:$0xff] %vm679, %v676
        %s682 = sand.u32 %s126, 1
        %s683 = scalar_lea.sflag [#allocation5], %s682
        %s684 = sand.u32 %s126, 1
        %s685 = smul.addr %s684, 16
        %s686 = scalar_lea.vmem [#allocation9], %s685
        // Predicated region
        $region49: #{tpu_custom_call.1} parent=35 // pred_check
          %p687 = pneg %p136
        $region50: #{tpu_custom_call.1} parent=35 // pred_check_branch
          %689 = sbr.rel (%p687) target = $region52
        $region51: #{tpu_custom_call.1} parent=35 // pred_region
          %s691 = ssub.s32 256, 256
          %692 = vsyncadd %s683, %s691
          %s693 = smul.addr %s24, 2
          %s694 = smul.addr %s693, 128
          %s695 = scalar_lea.hbm %s4, %s694
          %s696 = sshll.u32 %s686, 4
          %s697 = int_to_ptr.vmem [resolvable:$true] %s696
          %702 = dma.vmem_to_hbm [thread:$0]  %s697, 256, %s695, %s683, 128, 128, 8
        $region52: #{tpu_custom_call.1} parent=35 // pred_fallthru
          _
      $region36: #{tpu_custom_call.1} parent=5 // pred_fallthru
        _
      %p703 = scmp.le.s32.totalorder 2, %s19
      // Predicated region
      $region53: #{tpu_custom_call.1} parent=5 // pred_check
        %p704 = pneg %p703
      $region54: #{tpu_custom_call.1} parent=5 // pred_check_branch
        %706 = sbr.rel (%p704) target = $region56
      $region55: #{tpu_custom_call.1} parent=5 // pred_region
        %s707 = ssub.s32 %s19, 2
        // Predicated region
        $region57: #{tpu_custom_call.1} parent=55 // pred_check
          %p708 = pneg %p142
        $region58: #{tpu_custom_call.1} parent=55 // pred_check_branch
          %710 = sbr.rel (%p708) target = $region60
        $region59: #{tpu_custom_call.1} parent=55 // pred_region
          %s711 = sand.u32 %s127, 1
          %s712 = scalar_lea.sflag [#allocation5], %s711
          %s713 = sand.u32 %s127, 1
          %s714 = smul.addr %s713, 16
          %s715 = scalar_lea.vmem [#allocation9], %s714
          %716 = dma.done %s712, 256
        $region60: #{tpu_custom_call.1} parent=55 // pred_fallthru
          _
      $region56: #{tpu_custom_call.1} parent=5 // pred_fallthru
        _
    $region6: #{tpu_custom_call.1} parent=1 // loop_footer
      %s23 = sadd.s32 1, %s19
    $region7: #{tpu_custom_call.1} parent=1 // loop_footer_branch
      %18 = sbr.rel target = $region3
    $region8: #{tpu_custom_call.1} parent=1 // loop_exit
      _
    %717 = vsyncpa [#allocation4], 1
    %s718 = scalar_lea.sflag [#allocation4], 1
    %719 = vsyncpa %s718, 1
    %720 = vsyncpa [#allocation7], 1
    %s721 = scalar_lea.sflag [#allocation7], 1
    %722 = vsyncpa %s721, 1
    %723 = vsyncpa [#allocation5], 1
    %s724 = scalar_lea.sflag [#allocation5], 1
    %725 = vsyncpa %s724, 1

// kernel: tpu_custom_call.1
$region0: #{tpu_custom_call.1}
  #allocation0 [shape = 'u32[]', space=smem, size = 0x4, offset = 0x4, fixed_abs, tag = 'smem constant byte address 0x4 - core index']
  #allocation1 [shape = 'u32[144,128]{1,0:T(1,128)}', space=vmem, size = 0x12000, scoped, tag = 'internal scratch']
  #allocation2 [shape = 'f32[1,16,32]{2,1,0:T(8,128)}', space=vmem, size = 0x2000, scoped, tag = 'scratch operand']
  %s0 = inlined_call_operand.hbm [shape: f32[2,8,32], index: 0, kind: input, shape index: {}]
  %s1 = inlined_call_operand.hbm [shape: f32[2,16,32], index: 1, kind: input, shape index: {}]
  %s2 = inlined_call_operand.hbm [shape: f32[32,32], index: 2, kind: input, shape index: {}]
  %s3 = inlined_call_operand.vmem [shape: f32[1,32], index: 3, kind: input, shape index: {}]
  %s4 = inlined_call_operand.hbm [shape: f32[2,16,64], index: 4, kind: output, shape index: {}]
  %s5 = sld [smem:[#allocation0]]
  $region61: #{tpu_custom_call.1} parent=0
    _
  %s7 = ssub.s32 1, %s5
  %s8 = scalar_select 0, %s7, %s5
  $region1: #{tpu_custom_call.1} parent=0
    #allocation3 [shape = 'u8[8192]{0}', space=vmem, size = 0x2000, scoped, tag = 'input window, operand 0']
    #allocation4 [shape = 's32[2]{0}', space=sflag, size = 0x8, scoped, tag = 'scoped memory for tpu_custom_call.1']
    #allocation5 [shape = 's32[2]{0}', space=sflag, size = 0x8, scoped, tag = 'scoped memory for tpu_custom_call.1']
    #allocation6 [shape = 'u8[16384]{0}', space=vmem, size = 0x4000, scoped, tag = 'input window, operand 1']
    #allocation7 [shape = 's32[2]{0}', space=sflag, size = 0x8, scoped, tag = 'scoped memory for tpu_custom_call.1']
    #allocation8 [shape = 'u8[16384]{0}', space=vmem, size = 0x4000, scoped, tag = 'input window, operand 2, single buffered']
    #allocation9 [shape = 'u8[16384]{0}', space=vmem, size = 0x4000, scoped, tag = 'output window, operand 0']
    %9 = vsyncpa [#allocation4], 0
    %s10 = scalar_lea.sflag [#allocation4], 1
    %11 = vsyncpa %s10, 0
    %12 = vsyncpa [#allocation7], 0
    %s13 = scalar_lea.sflag [#allocation7], 1
    %14 = vsyncpa %s13, 0
    %15 = vsyncpa [#allocation5], 0
    %s16 = scalar_lea.sflag [#allocation5], 1
    %17 = vsyncpa %s16, 0
    loop: start=0, step=1, limit=4
    $region2: #{tpu_custom_call.1} parent=1 // loop_pre_header
      _
    $region3: #{tpu_custom_call.1} parent=1 // loop_header
      %s19 = sphi 0, %s23
      %p20 = scmp.ge.s32.totalorder %s19, 4
      %s29 = sphi 0, %s31
      %s32 = sphi 0, %s29
      %s33 = sphi 0, %s32
      %s49 = sphi 0, %s33
      %s55 = sphi 0, %s57
      %s58 = sphi 0, %s55
      %s59 = sphi 0, %s58
      %s75 = sphi 0, %s59
      %s79 = sphi 0, %s79
      %s81 = sphi 0, %s79
      %s82 = sphi 0, %s81
      %s96 = sphi 0, %s82
      %s100 = sphi 0, %s100
      %s102 = sphi 0, %s100
      %s103 = sphi 0, %s102
      %s117 = sphi 0, %s103
      %s123 = sphi 0, %s125
      %s126 = sphi 0, %s123
      %s127 = sphi 0, %s126
      %s143 = sphi 0, %s127
    $region4: #{tpu_custom_call.1} parent=1 // loop_header_branch
      %22 = sbr.rel (%p20) target = $region8
    $region5: #{tpu_custom_call.1} parent=1 // loop_body
      %s24 = ssub.s32 %s19, 1
      %s25 = ssub.s32 %s19, 2
      %s26 = sadd.s32 %s19, 1
      %s27 = ssub.s32 %s19, %s26
      %p28 = scmp.eq.s32.totalorder %s27, 0
      %s30 = sadd.s32 %s29, 1
      %s31 = scalar_select %p28, %s29, %s30
      %p34 = pneg %p28
      %p35 = scmp.eq.s32.totalorder %s19, 1
      %p36 = por %p34, %p35
      %p37 = scmp.ne.s32.totalorder %s29, %s32
      %p38 = scmp.eq.s32.totalorder %s19, 0
      %p39 = por %p37, %p38
      %p40 = scmp.ne.s32.totalorder %s29, %s32
      %p41 = scmp.eq.s32.totalorder %s24, 1
      %p42 = por %p40, %p41
      %p43 = scmp.ne.s32.totalorder %s32, %s33
      %p44 = scmp.eq.s32.totalorder %s24, 0
      %p45 = por %p43, %p44
      %p46 = scmp.ne.s32.totalorder %s32, %s33
      %p47 = scmp.eq.s32.totalorder %s25, 1
      %p48 = por %p46, %p47
      %p50 = scmp.ne.s32.totalorder %s33, %s49
      %p51 = scmp.eq.s32.totalorder %s25, 0
      %p52 = por %p50, %p51
      %s53 = ssub.s32 %s19, %s26
      %p54 = scmp.eq.s32.totalorder %s53, 0
      %s56 = sadd.s32 %s55, 1
      %s57 = scalar_select %p54, %s55, %s56
      %p60 = pneg %p54
      %p61 = scmp.eq.s32.totalorder %s19, 1
      %p62 = por %p60, %p61
      %p63 = scmp.ne.s32.totalorder %s55, %s58
      %p64 = scmp.eq.s32.totalorder %s19, 0
      %p65 = por %p63, %p64
      %p66 = scmp.ne.s32.totalorder %s55, %s58
      %p67 = scmp.eq.s32.totalorder %s24, 1
      %p68 = por %p66, %p67
      %p69 = scmp.ne.s32.totalorder %s58, %s59
      %p70 = scmp.eq.s32.totalorder %s24, 0
      %p71 = por %p69, %p70
      %p72 = scmp.ne.s32.totalorder %s58, %s59
      %p73 = scmp.eq.s32.totalorder %s25, 1
      %p74 = por %p72, %p73
      %p76 = scmp.ne.s32.totalorder %s59, %s75
      %p77 = scmp.eq.s32.totalorder %s25, 0
      %p78 = por %p76, %p77
      %s80 = sadd.s32 %s79, 1
      %p83 = scmp.eq.s32.totalorder %s19, 1
      %p84 = scmp.ne.s32.totalorder %s79, %s81
      %p85 = scmp.eq.s32.totalorder %s19, 0
      %p86 = por %p84, %p85
      %p87 = scmp.ne.s32.totalorder %s79, %s81
      %p88 = scmp.eq.s32.totalorder %s24, 1
      %p89 = por %p87, %p88
      %p90 = scmp.ne.s32.totalorder %s81, %s82
      %p91 = scmp.eq.s32.totalorder %s24, 0
      %p92 = por %p90, %p91
      %p93 = scmp.ne.s32.totalorder %s81, %s82
      %p94 = scmp.eq.s32.totalorder %s25, 1
      %p95 = por %p93, %p94
      %p97 = scmp.ne.s32.totalorder %s82, %s96
      %p98 = scmp.eq.s32.totalorder %s25, 0
      %p99 = por %p97, %p98
      %s101 = sadd.s32 %s100, 1
      %p104 = scmp.eq.s32.totalorder %s19, 1
      %p105 = scmp.ne.s32.totalorder %s100, %s102
      %p106 = scmp.eq.s32.totalorder %s19, 0
      %p107 = por %p105, %p106
      %p108 = scmp.ne.s32.totalorder %s100, %s102
      %p109 = scmp.eq.s32.totalorder %s24, 1
      %p110 = por %p108, %p109
      %p111 = scmp.ne.s32.totalorder %s102, %s103
      %p112 = scmp.eq.s32.totalorder %s24, 0
      %p113 = por %p111, %p112
      %p114 = scmp.ne.s32.totalorder %s102, %s103
      %p115 = scmp.eq.s32.totalorder %s25, 1
      %p116 = por %p114, %p115
      %p118 = scmp.ne.s32.totalorder %s103, %s117
      %p119 = scmp.eq.s32.totalorder %s25, 0
      %p120 = por %p118, %p119
      %s121 = ssub.s32 %s19, %s26
      %p122 = scmp.eq.s32.totalorder %s121, 0
      %s124 = sadd.s32 %s123, 1
      %s125 = scalar_select %p122, %s123, %s124
      %p128 = pneg %p122
      %p129 = scmp.eq.s32.totalorder %s19, 1
      %p130 = por %p128, %p129
      %p131 = scmp.ne.s32.totalorder %s123, %s126
      %p132 = scmp.eq.s32.totalorder %s19, 0
      %p133 = por %p131, %p132
      %p134 = scmp.ne.s32.totalorder %s123, %s126
      %p135 = scmp.eq.s32.totalorder %s24, 1
      %p136 = por %p134, %p135
      %p137 = scmp.ne.s32.totalorder %s126, %s127
      %p138 = scmp.eq.s32.totalorder %s24, 0
      %p139 = por %p137, %p138
      %p140 = scmp.ne.s32.totalorder %s126, %s127
      %p141 = scmp.eq.s32.totalorder %s25, 1
      %p142 = por %p140, %p141
      %p144 = scmp.ne.s32.totalorder %s127, %s143
      %p145 = scmp.eq.s32.totalorder %s25, 0
      %p146 = por %p144, %p145
      %p147 = scmp.le.s32.totalorder 1, %s19
      %p148 = scmp.lt.s32.totalorder %s19, 3
      %p149 = pnand %p147, %p148
      %p150 = pneg %p149
      // Predicated region
      $region9: #{tpu_custom_call.1} parent=5 // pred_check
        _
      $region10: #{tpu_custom_call.1} parent=5 // pred_check_branch
        %152 = sbr.rel (%p149) target = $region12
      $region11: #{tpu_custom_call.1} parent=5 // pred_region
        %s153 = ssub.s32 %s19, 1
        // Predicated region
        $region13: #{tpu_custom_call.1} parent=11 // pred_check
          %p154 = pneg %p92
        $region14: #{tpu_custom_call.1} parent=11 // pred_check_branch
          %156 = sbr.rel (%p154) target = $region16
        $region15: #{tpu_custom_call.1} parent=11 // pred_region
          %s158 = ssub.s32 512, 512
          %159 = vsyncadd [#allocation7], %s158
          %s160 = sshll.u32 [#allocation8], 4
          %s161 = int_to_ptr.vmem [resolvable:$true] %s160
          %166 = dma.hbm_to_vmem [thread:$0]  %s2, 512, %s161, [#allocation7], 128, 128, 8
        $region16: #{tpu_custom_call.1} parent=11 // pred_fallthru
          _
        // Predicated region
        $region17: #{tpu_custom_call.1} parent=11 // pred_check
          %p167 = pneg %p113
        $region18: #{tpu_custom_call.1} parent=11 // pred_check_branch
          %169 = sbr.rel (%p167) target = $region20
        $region19: #{tpu_custom_call.1} parent=11 // pred_region
          _
        $region20: #{tpu_custom_call.1} parent=11 // pred_fallthru
          _
      $region12: #{tpu_custom_call.1} parent=5 // pred_fallthru
        _
      %p170 = scmp.lt.s32.totalorder %s19, 2
      // Predicated region
      $region21: #{tpu_custom_call.1} parent=5 // pred_check
        %p171 = pneg %p170
      $region22: #{tpu_custom_call.1} parent=5 // pred_check_branch
        %173 = sbr.rel (%p171) target = $region24
      $region23: #{tpu_custom_call.1} parent=5 // pred_region
        // Predicated region
        $region25: #{tpu_custom_call.1} parent=23 // pred_check
          %p174 = pneg %p39
        $region26: #{tpu_custom_call.1} parent=23 // pred_check_branch
          %176 = sbr.rel (%p174) target = $region28
        $region27: #{tpu_custom_call.1} parent=23 // pred_region
          %s177 = sand.u32 %s29, 1
          %s178 = scalar_lea.sflag [#allocation4], %s177
          %s179 = sand.u32 %s29, 1
          %s180 = smul.addr %s179, 8
          %s181 = scalar_lea.vmem [#allocation3], %s180
          %s183 = ssub.s32 128, 128
          %184 = vsyncadd %s178, %s183
          %s185 = smul.addr %s19, 128
          %s186 = scalar_lea.hbm %s0, %s185
          %s188 = sshll.u32 %s181, 4
          %s189 = int_to_ptr.vmem [resolvable:$true] %s188
          %191 = dma.hbm_to_vmem [thread:$0]  %s186, 128, %s189, %s178
        $region28: #{tpu_custom_call.1} parent=23 // pred_fallthru
          _
        // Predicated region
        $region29: #{tpu_custom_call.1} parent=23 // pred_check
          %p192 = pneg %p65
        $region30: #{tpu_custom_call.1} parent=23 // pred_check_branch
          %194 = sbr.rel (%p192) target = $region32
        $region31: #{tpu_custom_call.1} parent=23 // pred_region
          %s195 = sand.u32 %s19, 1
          %s196 = scalar_lea.sflag [#allocation7], %s195
          %s197 = sand.u32 %s55, 1
          %s198 = smul.addr %s197, 16
          %s199 = scalar_lea.vmem [#allocation6], %s198
          %s201 = ssub.s32 256, 256
          %202 = vsyncadd %s196, %s201
          %s203 = smul.addr %s19, 2
          %s204 = smul.addr %s203, 128
          %s205 = scalar_lea.hbm %s1, %s204
          %s206 = sshll.u32 %s199, 4
          %s207 = int_to_ptr.vmem [resolvable:$true] %s206
          %212 = dma.hbm_to_vmem [thread:$0]  %s205, 256, %s207, %s196, 128, 128, 8
        $region32: #{tpu_custom_call.1} parent=23 // pred_fallthru
          _
      $region24: #{tpu_custom_call.1} parent=5 // pred_fallthru
        _
      %p213 = scmp.le.s32.totalorder 1, %s19
      %p214 = scmp.lt.s32.totalorder %s19, 3
      %p215 = pnand %p213, %p214
      %p216 = pneg %p215
      // Predicated region
      $region33: #{tpu_custom_call.1} parent=5 // pred_check
        _
      $region34: #{tpu_custom_call.1} parent=5 // pred_check_branch
        %218 = sbr.rel (%p215) target = $region36
      $region35: #{tpu_custom_call.1} parent=5 // pred_region
        %s219 = ssub.s32 %s19, 1
        %s220 = sand.u32 %s32, 1
        %s221 = scalar_lea.sflag [#allocation4], %s220
        %s222 = sand.u32 %s32, 1
        %s223 = smul.addr %s222, 8
        %s224 = scalar_lea.vmem [#allocation3], %s223
        // Predicated region
        $region37: #{tpu_custom_call.1} parent=35 // pred_check
          %p225 = pneg %p45
        $region38: #{tpu_custom_call.1} parent=35 // pred_check_branch
          %227 = sbr.rel (%p225) target = $region40
        $region39: #{tpu_custom_call.1} parent=35 // pred_region
          %228 = dma.done %s221, 128
        $region40: #{tpu_custom_call.1} parent=35 // pred_fallthru
          _
        %s229 = sand.u32 %s24, 1
        %s230 = scalar_lea.sflag [#allocation7], %s229
        %s231 = sand.u32 %s58, 1
        %s232 = smul.addr %s231, 16
        %s233 = scalar_lea.vmem [#allocation6], %s232
        // Predicated region
        $region41: #{tpu_custom_call.1} parent=35 // pred_check
          %p234 = pneg %p71
        $region42: #{tpu_custom_call.1} parent=35 // pred_check_branch
          %236 = sbr.rel (%p234) target = $region44
        $region43: #{tpu_custom_call.1} parent=35 // pred_region
          %237 = dma.done %s230, 256
        $region44: #{tpu_custom_call.1} parent=35 // pred_fallthru
          _
        // Predicated region
        $region45: #{tpu_custom_call.1} parent=35 // pred_check
          %p238 = pneg %p92
        $region46: #{tpu_custom_call.1} parent=35 // pred_check_branch
          %240 = sbr.rel (%p238) target = $region48
        $region47: #{tpu_custom_call.1} parent=35 // pred_region
          %241 = dma.done [#allocation7], 512
        $region48: #{tpu_custom_call.1} parent=35 // pred_fallthru
          _
        %s242 = sand.u32 %s32, 1
        %s243 = scalar_lea.sflag [#allocation4], %s242
        %s244 = sand.u32 %s32, 1
        %s245 = smul.addr %s244, 8
        %s246 = scalar_lea.vmem [#allocation3], %s245
        %p247 = pneg %p45
        %p248 = pneg %p42
        %s249 = sand.u32 %s24, 1
        %s250 = scalar_lea.sflag [#allocation7], %s249
        %s251 = sand.u32 %s58, 1
        %s252 = smul.addr %s251, 16
        %s253 = scalar_lea.vmem [#allocation6], %s252
        %p254 = pneg %p71
        %p255 = pneg %p68
        %p256 = pneg %p92
        %p257 = pneg %p89
        %p258 = pneg %p113
        %p259 = pneg %p110
        %p260 = pneg %p139
        %p261 = pneg %p136
        %s262 = sand.u32 %s126, 1
        %s263 = scalar_lea.sflag [#allocation5], %s262
        %s264 = sand.u32 %s126, 1
        %s265 = smul.addr %s264, 16
        %s266 = scalar_lea.vmem [#allocation9], %s265
        %v267 = vld [vmem:[#allocation8] sm:$0xff]
        %v268 = vld [vmem:[#allocation8 + $0x8] sm:$0xff]
        %v269 = vld [vmem:[#allocation8 + $0x10] sm:$0xff]
        %v270 = vld [vmem:[#allocation8 + $0x18] sm:$0xff]
        %v271 = vld [vmem:[%s3] sm:$0x1]
        %v272 = vld [vmem:[%s233] sm:$0xff]
        %v273 = vld [vmem:[%s233 + $0x8] sm:$0xff]
        %v275 = vlaneseq
        %v276 = vshrl.u32 %v275, 7
        %v277 = vsub.s32 0, %v276
        %v278 = vrot.slane %v271, %v277
        %vm280 = vcmask 261120
        %v282 = vsel %vm280, %v272, 0
        %v285 = vsel %vm280, %v273, 0
        %287 = vmatprep.subr.mxu0 0.0
        %288 = vmatpush1.msra.mxu0 %v267
        %289 = vmatprep.subr.mxu0 0.0
        %290 = vmatpush1.msra.mxu0 %v268
        %291 = vmatprep.subr.mxu0 0.0
        %292 = vmatpush1.msra.mxu0 %v269
        %293 = vmatprep.subr.mxu0 0.0
        %294 = vmatpush1.msra.mxu0 %v270
        %295 = vmatprep.subr.mxu0 0.0
        %296 = vmatpush1.msra.mxu0 0.0
        %297 = vmatprep.subr.mxu0 0.0
        %298 = vmatpush1.msra.mxu0 0.0
        %299 = vmatprep.subr.mxu0 0.0
        %300 = vmatpush1.msra.mxu0 0.0
        %301 = vmatprep.subr.mxu0 0.0
        %302 = vmatpush1.msra.mxu0 0.0
        %303 = vmatprep.subr.mxu0 0.0
        %304 = vmatpush1.msra.mxu0 0.0
        %305 = vmatprep.subr.mxu0 0.0
        %306 = vmatpush1.msra.mxu0 0.0
        %307 = vmatprep.subr.mxu0 0.0
        %308 = vmatpush1.msra.mxu0 0.0
        %309 = vmatprep.subr.mxu0 0.0
        %310 = vmatpush1.msra.mxu0 0.0
        %311 = vmatprep.subr.mxu0 0.0
        %312 = vmatpush1.msra.mxu0 0.0
        %313 = vmatprep.subr.mxu0 0.0
        %314 = vmatpush1.msra.mxu0 0.0
        %315 = vmatprep.subr.mxu0 0.0
        %316 = vmatpush1.msra.mxu0 0.0
        %317 = vmatprep.subr.mxu0 0.0
        %318 = vmatpush1.msra.mxu0 0.0
        %319 = vmatprep.subr.mxu0 0.0
        %320 = vmatpush1.msra.mxu0 0.0
        %321 = vmatprep.subr.mxu0 0.0
        %322 = vmatpush1.msra.mxu0 0.0
        %323 = vmatprep.subr.mxu0 0.0
        %324 = vmatpush1.msra.mxu0 0.0
        %325 = vmatprep.subr.mxu0 0.0
        %326 = vmatpush1.msra.mxu0 0.0
        %327 = vmatprep.subr.mxu0 0.0
        %328 = vmatpush1.msra.mxu0 0.0
        %329 = vmatprep.subr.mxu0 0.0
        %330 = vmatpush1.msra.mxu0 0.0
        %331 = vmatprep.subr.mxu0 0.0
        %332 = vmatpush1.msra.mxu0 0.0
        %333 = vmatprep.subr.mxu0 0.0
        %334 = vmatpush1.msra.mxu0 0.0
        %335 = vmatprep.subr.mxu0 0.0
        %336 = vmatpush1.msra.mxu0 0.0
        %337 = vmatprep.subr.mxu0 0.0
        %338 = vmatpush1.msra.mxu0 0.0
        %339 = vmatprep.subr.mxu0 0.0
        %340 = vmatpush1.msra.mxu0 0.0
        %341 = vmatprep.subr.mxu0 0.0
        %342 = vmatpush1.msra.mxu0 0.0
        %343 = vmatprep.subr.mxu0 0.0
        %344 = vmatpush1.msra.mxu0 0.0
        %345 = vmatprep.subr.mxu0 0.0
        %346 = vmatpush1.msra.mxu0 0.0
        %347 = vmatprep.subr.mxu0 0.0
        %348 = vmatpush1.msra.mxu0 0.0
        %349 = vmatprep.subr.mxu0 0.0
        %350 = vmatpush1.msra.mxu0 0.0
        %351 = vmatprep.mubr.f32.mxu0 0.0
        %352 = vmatmul.mubr.f32.gmra.mrb[0].mxu0 %v282
        %v353 = vpop.f32.mrb[0].mxu0
        %v354 = vadd.f32 %v278, %v353
        %v355 = vpop.f32.mrb[0].mxu0
        %356 = vmatprep.mubr.f32.mxu0 0.0
        %357 = vmatmul.mubr.f32.gmra.mrb[0].mxu0 %v285
        %v358 = vpop.f32.mrb[0].mxu0
        %v359 = vadd.f32 %v278, %v358
        %v360 = vpop.f32.mrb[0].mxu0
        %361 = vdwg.mxu0
        %v362 = vtanh.pop %v354
        %v363 = vtanh.pop %v359
        %364 = vst.msk [vmem:[#allocation2] sm:$0xff] %vm280, %v362
        %365 = vst.msk [vmem:[#allocation2 + $0x8] sm:$0xff] %vm280, %v363
        %v366 = vld [vmem:[%s224] sm:$0xff]
        %v367 = vld [vmem:[#allocation2] sm:$0xff]
        %v368 = vld [vmem:[#allocation2 + $0x8] sm:$0xff]
        %v370 = vsel %vm280, %v366, 0
        %v373 = vsel %vm280, %v367, 0
        %v376 = vsel %vm280, %v368, 0
        %378 = vmatprep.subr.mxu0 0.0
        %379 = vmatpush1.xpose.msra.mxu0 %v373
        %380 = vmatprep.subr.mxu0 0.0
        %381 = vmatpush1.xpose.msra.mxu0 %v376
        %382 = vmatprep.subr.mxu0 0.0
        %383 = vmatpush1.xpose.msra.mxu0 0.0
        %384 = vmatprep.subr.mxu0 0.0
        %385 = vmatpush1.xpose.msra.mxu0 0.0
        %386 = vmatprep.subr.mxu0 0.0
        %387 = vmatpush1.xpose.msra.mxu0 0.0
        %388 = vmatprep.subr.mxu0 0.0
        %389 = vmatpush1.xpose.msra.mxu0 0.0
        %390 = vmatprep.subr.mxu0 0.0
        %391 = vmatpush1.xpose.msra.mxu0 0.0
        %392 = vmatprep.subr.mxu0 0.0
        %393 = vmatpush1.xpose.msra.mxu0 0.0
        %394 = vmatprep.subr.mxu0 0.0
        %395 = vmatpush1.xpose.msra.mxu0 0.0
        %396 = vmatprep.subr.mxu0 0.0
        %397 = vmatpush1.xpose.msra.mxu0 0.0
        %398 = vmatprep.subr.mxu0 0.0
        %399 = vmatpush1.xpose.msra.mxu0 0.0
        %400 = vmatprep.subr.mxu0 0.0
        %401 = vmatpush1.xpose.msra.mxu0 0.0
        %402 = vmatprep.subr.mxu0 0.0
        %403 = vmatpush1.xpose.msra.mxu0 0.0
        %404 = vmatprep.subr.mxu0 0.0
        %405 = vmatpush1.xpose.msra.mxu0 0.0
        %406 = vmatprep.subr.mxu0 0.0
        %407 = vmatpush1.xpose.msra.mxu0 0.0
        %408 = vmatprep.subr.mxu0 0.0
        %409 = vmatpush1.xpose.msra.mxu0 0.0
        %410 = vmatprep.subr.mxu0 0.0
        %411 = vmatpush1.xpose.msra.mxu0 0.0
        %412 = vmatprep.subr.mxu0 0.0
        %413 = vmatpush1.xpose.msra.mxu0 0.0
        %414 = vmatprep.subr.mxu0 0.0
        %415 = vmatpush1.xpose.msra.mxu0 0.0
        %416 = vmatprep.subr.mxu0 0.0
        %417 = vmatpush1.xpose.msra.mxu0 0.0
        %418 = vmatprep.subr.mxu0 0.0
        %419 = vmatpush1.xpose.msra.mxu0 0.0
        %420 = vmatprep.subr.mxu0 0.0
        %421 = vmatpush1.xpose.msra.mxu0 0.0
        %422 = vmatprep.subr.mxu0 0.0
        %423 = vmatpush1.xpose.msra.mxu0 0.0
        %424 = vmatprep.subr.mxu0 0.0
        %425 = vmatpush1.xpose.msra.mxu0 0.0
        %426 = vmatprep.subr.mxu0 0.0
        %427 = vmatpush1.xpose.msra.mxu0 0.0
        %428 = vmatprep.subr.mxu0 0.0
        %429 = vmatpush1.xpose.msra.mxu0 0.0
        %430 = vmatprep.subr.mxu0 0.0
        %431 = vmatpush1.xpose.msra.mxu0 0.0
        %432 = vmatprep.subr.mxu0 0.0
        %433 = vmatpush1.xpose.msra.mxu0 0.0
        %434 = vmatprep.subr.mxu0 0.0
        %435 = vmatpush1.xpose.msra.mxu0 0.0
        %436 = vmatprep.subr.mxu0 0.0
        %437 = vmatpush1.xpose.msra.mxu0 0.0
        %438 = vmatprep.subr.mxu0 0.0
        %439 = vmatpush1.xpose.msra.mxu0 0.0
        %440 = vmatprep.subr.mxu0 0.0
        %441 = vmatpush1.xpose.msra.mxu0 0.0
        %442 = vmatprep.mubr.f32.mxu0 0.0
        %443 = vmatmul.mubr.f32.gmra.mrb[0].mxu0 %v370
        %v444 = vpop.f32.mrb[0].mxu0
        %v445 = vadd.f32 0.0, %v444
        %v446 = vpop.f32.mrb[0].mxu0
        %447 = vdwg.mxu0
        %vm448 = vcmask 130048
        %v449 = vsel %vm448, %v445, -inf
        %450 = vmax.xlane.f32.xlu0 %v449
        %v451 = vpop.xlane.xlu0 %450
        %v452 = vrot.slane %v451, 4
        %v453 = vmax.f32 %v451, %v452
        %v454 = vrot.slane %v453, 2
        %v455 = vmax.f32 %v453, %v454
        %v456 = vrot.slane %v455, 1
        %v457 = vmax.f32 %v455, %v456
        %v458 = vsub.f32 %v445, %v457
        %v459 = vmul.f32 %v458, 1.442695
        %v460 = vpow.pop %v459
        %461 = vxpose.xlu0.b32.start [1/16] %v460, 128
        %462 = vxpose.xlu0.b32.cont [2/16] 0.0, 128
        %463 = vxpose.xlu0.b32.cont [3/16] 0.0, 128
        %464 = vxpose.xlu0.b32.cont [4/16] 0.0, 128
        %465 = vxpose.xlu0.b32.cont [5/16] 0.0, 128
        %466 = vxpose.xlu0.b32.cont [6/16] 0.0, 128
        %467 = vxpose.xlu0.b32.cont [7/16] 0.0, 128
        %468 = vxpose.xlu0.b32.cont [8/16] 0.0, 128
        %469 = vxpose.xlu0.b32.cont [9/16] 0.0, 128
        %470 = vxpose.xlu0.b32.cont [10/16] 0.0, 128
        %471 = vxpose.xlu0.b32.cont [11/16] 0.0, 128
        %472 = vxpose.xlu0.b32.cont [12/16] 0.0, 128
        %473 = vxpose.xlu0.b32.cont [13/16] 0.0, 128
        %474 = vxpose.xlu0.b32.cont [14/16] 0.0, 128
        %475 = vxpose.xlu0.b32.cont [15/16] 0.0, 128
        %476 = vxpose.xlu0.b32.end [16/16] 0.0, 128
        %v477 = vpop.trf.xlu0
        %v478 = vpop.trf.xlu0
        %v479 = vpop.trf.xlu0
        %v480 = vpop.trf.xlu0
        %v481 = vpop.trf.xlu0
        %v482 = vpop.trf.xlu0
        %v483 = vpop.trf.xlu0
        %v484 = vpop.trf.xlu0
        %v485 = vpop.trf.xlu0
        %v486 = vpop.trf.xlu0
        %v487 = vpop.trf.xlu0
        %v488 = vpop.trf.xlu0
        %v489 = vpop.trf.xlu0
        %v490 = vpop.trf.xlu0
        %v491 = vpop.trf.xlu0
        %v492 = vpop.trf.xlu0
        %vm493 = vcmask 64512
        %v494 = vsel %vm493, %v477, 0.0
        %495 = vadd.xlane.f32.xlu0 %v494
        %v496 = vpop.xlane.xlu0 %495
        %v497 = vsel %vm493, %v478, 0.0
        %498 = vadd.xlane.f32.xlu0 %v497
        %v499 = vpop.xlane.xlu0 %498
        %v500 = vadd.f32 %v496, 1e-30
        %v501 = vadd.f32 %v499, 1e-30
        %v502 = vrcp.pop %v500
        %v503 = vmul.f32 1.0, %v502
        %v504 = vrcp.pop %v501
        %v505 = vmul.f32 1.0, %v504
        %v506 = vadd.f32 %v494, %v497
        %v507 = vrot.slane %v506, 4
        %v508 = vadd.f32 %v506, %v507
        %v509 = vrot.slane %v508, 2
        %v510 = vadd.f32 %v508, %v509
        %v511 = vrot.slane %v510, 1
        %v512 = vadd.f32 %v510, %v511
        %v513 = vadd.f32 %v512, 1e-30
        %v514 = vrcp.pop %v513
        %v515 = vmul.f32 1.0, %v514
        %v516 = vmul.f32 %v367, %v503
        %v517 = vmul.f32 %v368, %v505
        %v519 = vsel %vm448, %v460, 0
        %521 = vmatprep.subr.mxu0 0.0
        %522 = vmatpush1.msra.mxu0 %v516
        %523 = vmatprep.subr.mxu0 0.0
        %524 = vmatpush1.msra.mxu0 %v517
        %525 = vmatprep.subr.mxu0 0.0
        %526 = vmatpush1.msra.mxu0 0.0
        %527 = vmatprep.subr.mxu0 0.0
        %528 = vmatpush1.msra.mxu0 0.0
        %529 = vmatprep.subr.mxu0 0.0
        %530 = vmatpush1.msra.mxu0 0.0
        %531 = vmatprep.subr.mxu0 0.0
        %532 = vmatpush1.msra.mxu0 0.0
        %533 = vmatprep.subr.mxu0 0.0
        %534 = vmatpush1.msra.mxu0 0.0
        %535 = vmatprep.subr.mxu0 0.0
        %536 = vmatpush1.msra.mxu0 0.0
        %537 = vmatprep.subr.mxu0 0.0
        %538 = vmatpush1.msra.mxu0 0.0
        %539 = vmatprep.subr.mxu0 0.0
        %540 = vmatpush1.msra.mxu0 0.0
        %541 = vmatprep.subr.mxu0 0.0
        %542 = vmatpush1.msra.mxu0 0.0
        %543 = vmatprep.subr.mxu0 0.0
        %544 = vmatpush1.msra.mxu0 0.0
        %545 = vmatprep.subr.mxu0 0.0
        %546 = vmatpush1.msra.mxu0 0.0
        %547 = vmatprep.subr.mxu0 0.0
        %548 = vmatpush1.msra.mxu0 0.0
        %549 = vmatprep.subr.mxu0 0.0
        %550 = vmatpush1.msra.mxu0 0.0
        %551 = vmatprep.subr.mxu0 0.0
        %552 = vmatpush1.msra.mxu0 0.0
        %553 = vmatprep.subr.mxu0 0.0
        %554 = vmatpush1.msra.mxu0 0.0
        %555 = vmatprep.subr.mxu0 0.0
        %556 = vmatpush1.msra.mxu0 0.0
        %557 = vmatprep.subr.mxu0 0.0
        %558 = vmatpush1.msra.mxu0 0.0
        %559 = vmatprep.subr.mxu0 0.0
        %560 = vmatpush1.msra.mxu0 0.0
        %561 = vmatprep.subr.mxu0 0.0
        %562 = vmatpush1.msra.mxu0 0.0
        %563 = vmatprep.subr.mxu0 0.0
        %564 = vmatpush1.msra.mxu0 0.0
        %565 = vmatprep.subr.mxu0 0.0
        %566 = vmatpush1.msra.mxu0 0.0
        %567 = vmatprep.subr.mxu0 0.0
        %568 = vmatpush1.msra.mxu0 0.0
        %569 = vmatprep.subr.mxu0 0.0
        %570 = vmatpush1.msra.mxu0 0.0
        %571 = vmatprep.subr.mxu0 0.0
        %572 = vmatpush1.msra.mxu0 0.0
        %573 = vmatprep.subr.mxu0 0.0
        %574 = vmatpush1.msra.mxu0 0.0
        %575 = vmatprep.subr.mxu0 0.0
        %576 = vmatpush1.msra.mxu0 0.0
        %577 = vmatprep.subr.mxu0 0.0
        %578 = vmatpush1.msra.mxu0 0.0
        %579 = vmatprep.subr.mxu0 0.0
        %580 = vmatpush1.msra.mxu0 0.0
        %581 = vmatprep.subr.mxu0 0.0
        %582 = vmatpush1.msra.mxu0 0.0
        %583 = vmatprep.subr.mxu0 0.0
        %584 = vmatpush1.msra.mxu0 0.0
        %585 = vmatprep.mubr.f32.mxu0 0.0
        %586 = vmatmul.mubr.f32.gmra.mrb[0].mxu0 %v519
        %v587 = vpop.f32.mrb[0].mxu0
        %v588 = vadd.f32 0.0, %v587
        %v589 = vpop.f32.mrb[0].mxu0
        %590 = vdwg.mxu0
        %v591 = vmul.f32 %v477, %v515
        %v592 = vmul.f32 %v478, %v515
        %594 = vrot.lane.b32.xlu0 %v588, 32
        %v595 = vpop.permute.xlu0 %594
        %v597 = vsel %vm280, %v366, %v595
        %v599 = vsel %vm493, %v591, 0
        %v602 = vsel %vm493, %v592, 0
        %604 = vmatprep.subr.mxu0 0.0
        %605 = vmatpush1.msra.mxu0 %v597
        %606 = vmatprep.subr.mxu0 0.0
        %607 = vmatpush1.msra.mxu0 0.0
        %608 = vmatprep.subr.mxu0 0.0
        %609 = vmatpush1.msra.mxu0 0.0
        %610 = vmatprep.subr.mxu0 0.0
        %611 = vmatpush1.msra.mxu0 0.0
        %612 = vmatprep.subr.mxu0 0.0
        %613 = vmatpush1.msra.mxu0 0.0
        %614 = vmatprep.subr.mxu0 0.0
        %615 = vmatpush1.msra.mxu0 0.0
        %616 = vmatprep.subr.mxu0 0.0
        %617 = vmatpush1.msra.mxu0 0.0
        %618 = vmatprep.subr.mxu0 0.0
        %619 = vmatpush1.msra.mxu0 0.0
        %620 = vmatprep.subr.mxu0 0.0
        %621 = vmatpush1.msra.mxu0 0.0
        %622 = vmatprep.subr.mxu0 0.0
        %623 = vmatpush1.msra.mxu0 0.0
        %624 = vmatprep.subr.mxu0 0.0
        %625 = vmatpush1.msra.mxu0 0.0
        %626 = vmatprep.subr.mxu0 0.0
        %627 = vmatpush1.msra.mxu0 0.0
        %628 = vmatprep.subr.mxu0 0.0
        %629 = vmatpush1.msra.mxu0 0.0
        %630 = vmatprep.subr.mxu0 0.0
        %631 = vmatpush1.msra.mxu0 0.0
        %632 = vmatprep.subr.mxu0 0.0
        %633 = vmatpush1.msra.mxu0 0.0
        %634 = vmatprep.subr.mxu0 0.0
        %635 = vmatpush1.msra.mxu0 0.0
        %636 = vmatprep.subr.mxu0 0.0
        %637 = vmatpush1.msra.mxu0 0.0
        %638 = vmatprep.subr.mxu0 0.0
        %639 = vmatpush1.msra.mxu0 0.0
        %640 = vmatprep.subr.mxu0 0.0
        %641 = vmatpush1.msra.mxu0 0.0
        %642 = vmatprep.subr.mxu0 0.0
        %643 = vmatpush1.msra.mxu0 0.0
        %644 = vmatprep.subr.mxu0 0.0
        %645 = vmatpush1.msra.mxu0 0.0
        %646 = vmatprep.subr.mxu0 0.0
        %647 = vmatpush1.msra.mxu0 0.0
        %648 = vmatprep.subr.mxu0 0.0
        %649 = vmatpush1.msra.mxu0 0.0
        %650 = vmatprep.subr.mxu0 0.0
        %651 = vmatpush1.msra.mxu0 0.0
        %652 = vmatprep.subr.mxu0 0.0
        %653 = vmatpush1.msra.mxu0 0.0
        %654 = vmatprep.subr.mxu0 0.0
        %655 = vmatpush1.msra.mxu0 0.0
        %656 = vmatprep.subr.mxu0 0.0
        %657 = vmatpush1.msra.mxu0 0.0
        %658 = vmatprep.subr.mxu0 0.0
        %659 = vmatpush1.msra.mxu0 0.0
        %660 = vmatprep.subr.mxu0 0.0
        %661 = vmatpush1.msra.mxu0 0.0
        %662 = vmatprep.subr.mxu0 0.0
        %663 = vmatpush1.msra.mxu0 0.0
        %664 = vmatprep.subr.mxu0 0.0
        %665 = vmatpush1.msra.mxu0 0.0
        %666 = vmatprep.subr.mxu0 0.0
        %667 = vmatpush1.msra.mxu0 0.0
        %668 = vmatprep.mubr.f32.mxu0 0.0
        %669 = vmatmul.mubr.f32.gmra.mrb[0].mxu0 %v599
        %v670 = vpop.f32.mrb[0].mxu0
        %v671 = vadd.f32 0.0, %v670
        %v672 = vpop.f32.mrb[0].mxu0
        %673 = vmatprep.mubr.f32.mxu0 0.0
        %674 = vmatmul.mubr.f32.gmra.mrb[0].mxu0 %v602
        %v675 = vpop.f32.mrb[0].mxu0
        %v676 = vadd.f32 0.0, %v675
        %v677 = vpop.f32.mrb[0].mxu0
        %678 = vdwg.mxu0
        %vm679 = vcmask 523264
        %680 = vst.msk [vmem:[%s266] sm:$0xff] %vm679, %v671
        %681 = vst.msk [vmem:[%s266 + $0x8] sm:$0xff] %vm679, %v676
        %s682 = sand.u32 %s126, 1
        %s683 = scalar_lea.sflag [#allocation5], %s682
        %s684 = sand.u32 %s126, 1
        %s685 = smul.addr %s684, 16
        %s686 = scalar_lea.vmem [#allocation9], %s685
        // Predicated region
        $region49: #{tpu_custom_call.1} parent=35 // pred_check
          %p687 = pneg %p136
        $region50: #{tpu_custom_call.1} parent=35 // pred_check_branch
          %689 = sbr.rel (%p687) target = $region52
        $region51: #{tpu_custom_call.1} parent=35 // pred_region
          %s691 = ssub.s32 256, 256
          %692 = vsyncadd %s683, %s691
          %s693 = smul.addr %s24, 2
          %s694 = smul.addr %s693, 128
          %s695 = scalar_lea.hbm %s4, %s694
          %s696 = sshll.u32 %s686, 4
          %s697 = int_to_ptr.vmem [resolvable:$true] %s696
          %702 = dma.vmem_to_hbm [thread:$0]  %s697, 256, %s695, %s683, 128, 128, 8
        $region52: #{tpu_custom_call.1} parent=35 // pred_fallthru
          _
      $region36: #{tpu_custom_call.1} parent=5 // pred_fallthru
        _
      %p703 = scmp.le.s32.totalorder 2, %s19
      // Predicated region
      $region53: #{tpu_custom_call.1} parent=5 // pred_check
        %p704 = pneg %p703
      $region54: #{tpu_custom_call.1} parent=5 // pred_check_branch
        %706 = sbr.rel (%p704) target = $region56
      $region55: #{tpu_custom_call.1} parent=5 // pred_region
        %s707 = ssub.s32 %s19, 2
        // Predicated region
        $region57: #{tpu_custom_call.1} parent=55 // pred_check
          %p708 = pneg %p142
        $region58: #{tpu_custom_call.1} parent=55 // pred_check_branch
          %710 = sbr.rel (%p708) target = $region60
        $region59: #{tpu_custom_call.1} parent=55 // pred_region
          %s711 = sand.u32 %s127, 1
          %s712 = scalar_lea.sflag [#allocation5], %s711
          %s713 = sand.u32 %s127, 1
          %s714 = smul.addr %s713, 16
          %s715 = scalar_lea.vmem [#allocation9], %s714
          %716 = dma.done %s712, 256
        $region60: #{tpu_custom_call.1} parent=55 // pred_fallthru
          _
      $region56: #{tpu_custom_call.1} parent=5 // pred_fallthru
        _
    $region6: #{tpu_custom_call.1} parent=1 // loop_footer
      %s23 = sadd.s32 1, %s19
    $region7: #{tpu_custom_call.1} parent=1 // loop_footer_branch
      %18 = sbr.rel target = $region3
    $region8: #{tpu_custom_call.1} parent=1 // loop_exit
      _
    %717 = vsyncpa [#allocation4], 1
    %s718 = scalar_lea.sflag [#allocation4], 1
    %719 = vsyncpa %s718, 1
    %720 = vsyncpa [#allocation7], 1
    %s721 = scalar_lea.sflag [#allocation7], 1
    %722 = vsyncpa %s721, 1
    %723 = vsyncpa [#allocation5], 1
    %s724 = scalar_lea.sflag [#allocation5], 1
    %725 = vsyncpa %s724, 1

</llo_original>
